<compile_context>
chip_gen: v7x
topology: tpu7x:2x2x1
jax: 0.10.0
libtpu: 0.0.40
codegen_flags: <defaults>
</compile_context>

<pallas_src>
import math

import jax
import jax.numpy as jnp
from jax.experimental import pallas as pl
from jax.experimental.pallas import tpu as pltpu

_LANE = 128                  # tb: one lane-dense output chunk along L
_VMEM_BUDGET = 24 << 20      # target double-buffered working set (all gens)
_VMEM_LIMIT = 40 << 20       # scoped limit: < 48 MiB headroom rule on v7x


def _cdiv(a, b):
    return -(-a // b)


def _s4d_mm_kernel(w_ref, z_ref, k_ref):
    # w_ref: (th, ta, 2*N2)  = [Re(C2*Za) | Im(C2*Za)]   (per h-block, per a-block)
    # z_ref: (th, 2*N2, tb)  = [[Re(Zb)], [-Im(Zb)]]      (per h-block, reused over a)
    # k_ref: (th, ta, tb)    = Re( (C2*Za) @ Zb )         batched real matmul on MXU
    k_ref[...] = jnp.einsum(
        'han,hnb->hab', w_ref[...], z_ref[...],
        preferred_element_type=jnp.float32,
    ).astype(k_ref.dtype)
    # TODO(synk): bf16 w/z tables (f32 accum) would halve input HBM traffic and
    # double MXU rate, but cancellation in the oscillatory terms makes the
    # 1e-3 relative accuracy target borderline; kept f32.


def _plan_tiles(H, L, N2):
    """Pick (th, h_pad, ta, a_len, a_raw) against the VMEM budget."""
    tb = _LANE
    a_raw = _cdiv(L, tb)                     # number of 128-wide L chunks

    # th: largest candidate that divides H (avoids h padding); fall back to 8.
    th = 8
    for cand in (64, 32, 16, 8):
        if H % cand == 0:
            th = cand
            break
    h_pad = _cdiv(H, th) * th

    # ta: as large as the VMEM budget allows (MXU occupancy ~ ta/(ta+2*N2)),
    # capped at 256.  Padding is bounded by balancing the a-blocks instead of
    # rounding a_len up to a full extra block.
    fixed = 2 * th * (2 * N2) * tb * 4          # double-buffered Zb block
    per_ta = 2 * th * (2 * N2 + tb) * 4         # double-buffered w + out per chunk
    ta_cap = (_VMEM_BUDGET - fixed) // per_ta
    ta_cap = max(8, min(256, (ta_cap // 8) * 8))

    if a_raw <= ta_cap:
        ta = a_raw                              # full-extent block, no padding
        a_len = a_raw
    else:
        n_blocks = _cdiv(a_raw, ta_cap)
        ta = _cdiv(_cdiv(a_raw, n_blocks), 8) * 8   # multiple of 8, balanced
        a_len = n_blocks * ta                   # padding < 8 chunks per block
    return th, h_pad, ta, a_len, a_raw, tb


def s4d_pallas_forward(ar, ai, cr, ci, L):
    """K[h, l] = Re( sum_n (cr+i*ci)[h,n] * exp((ar+i*ai)[h,n] * l) ), l=0..L-1.

    ar/ai = real/imag of dt*A; cr/ci = real/imag of 2*C*(exp(dtA)-1)/A.
    """
    H, N2 = ar.shape
    th, h_pad, ta, a_len, a_raw, tb = _plan_tiles(H, L, N2)

    if h_pad != H:
        pad = ((0, h_pad - H), (0, 0))
        ar, ai, cr, ci = (jnp.pad(x, pad) for x in (ar, ai, cr, ci))

    # ---- plain-JAX glue: small Vandermonde tables ---------------------------
    dtA = ar + 1j * ai                                   # (Hp, N2) complex64
    c2 = cr + 1j * ci                                    # includes the 2x fold
    # Clamp padded a-chunks so exp() cannot overflow even if this helper is
    # ever reused with Re(dtA) >= 0 (here Re(dtA) < 0: pure decay).
    a_idx = jnp.minimum(jnp.arange(a_len, dtype=jnp.float32),
                        float(a_raw - 1)) * float(tb)
    b_idx = jnp.arange(tb, dtype=jnp.float32)

    # Build wcat directly in its final (Hp, a_len, 2*N2) layout (no transpose).
    za = jnp.exp(dtA[:, None, :] * a_idx[None, :, None])        # (Hp, a_len, N2)
    w = c2[:, None, :] * za
    wcat = jnp.concatenate([w.real, w.imag], axis=-1).astype(jnp.float32)

    zb = jnp.exp(dtA[:, :, None] * b_idx[None, None, :])        # (Hp, N2, tb)
    zcat = jnp.concatenate([zb.real, -zb.imag], axis=1).astype(jnp.float32)

    # ---- hot path: batched real matmuls on the MXU --------------------------
    grid = (h_pad // th, a_len // ta)          # a-axis innermost: Zb stays resident
    flops = 2 * h_pad * a_len * tb * (2 * N2)
    bytes_accessed = 4 * (wcat.size + zcat.size + h_pad * a_len * tb)

    k3 = pl.pallas_call(
        _s4d_mm_kernel,
        out_shape=jax.ShapeDtypeStruct((h_pad, a_len, tb), jnp.float32),
        grid_spec=pltpu.PrefetchScalarGridSpec(
            num_scalar_prefetch=0,
            grid=grid,
            in_specs=[
                pl.BlockSpec((th, ta, 2 * N2), lambda i, j: (i, j, 0)),
                # Zb block constant along the inner a-axis: one DMA per H block.
                pl.BlockSpec((th, 2 * N2, tb), lambda i, j: (i, 0, 0)),
            ],
            out_specs=pl.BlockSpec((th, ta, tb), lambda i, j: (i, j, 0)),
        ),
        compiler_params=pltpu.CompilerParams(
            dimension_semantics=("parallel", "parallel"),
            vmem_limit_bytes=_VMEM_LIMIT,
        ),
        cost_estimate=pl.CostEstimate(
            flops=flops, transcendentals=0, bytes_accessed=bytes_accessed),
    )(wcat, zcat)

    return k3.reshape(h_pad, a_len * tb)[:H, :L]


class S4DKernelParams:
    """Deterministic re-implementation of S4DKernel.__init__ + forward(L)."""

    def __init__(self, d_model, N=64, dt_min=0.001, dt_max=0.1, key=None):
        H = d_model
        N2 = N // 2
        if key is None:
            key = jax.random.PRNGKey(0)
        u = jax.random.uniform(key, (H,), dtype=jnp.float32)
        self.log_dt = u * (math.log(dt_max) - math.log(dt_min)) + math.log(dt_min)
        # C (and B) initialized to complex ones, stored as real/imag parts.
        self.C_re = jnp.ones((H, N2), jnp.float32)
        self.C_im = jnp.zeros((H, N2), jnp.float32)
        self.log_A_real = jnp.log(0.5 * jnp.ones((H, N2), jnp.float32))
        self.A_imag = math.pi * jnp.broadcast_to(
            jnp.arange(N2, dtype=jnp.float32)[None, :], (H, N2))
        self.H, self.N2 = H, N2
        # TODO(synk): step()/default_state() (recurrent inference path) not
        # implemented; only forward(L) is required here.

    def forward(self, L):
        # --- tiny per-(H,N2) glue: derive dt*A and the folded coefficient ---
        A_re = -jnp.exp(self.log_A_real)             # (H, N2)
        A_im = self.A_imag
        dt = jnp.exp(self.log_dt)[:, None]           # (H, 1)
        ar = (A_re * dt).astype(jnp.float32)         # real(dtA)
        ai = (A_im * dt).astype(jnp.float32)         # imag(dtA)
        dtA_c = ar + 1j * ai
        A_c = A_re + 1j * A_im
        # Fold the final 2x into the coefficient.
        C2 = 2.0 * (self.C_re + 1j * self.C_im) * (jnp.exp(dtA_c) - 1.0) / A_c
        cr = jnp.real(C2).astype(jnp.float32)
        ci = jnp.imag(C2).astype(jnp.float32)
        # --- hot path in Pallas (MXU matmuls) ---
        return s4d_pallas_forward(ar, ai, cr, ci, L)

    def forward_ref(self, L):
        """Pure-JAX complex reference matching the PyTorch forward exactly."""
        A = -jnp.exp(self.log_A_real) + 1j * self.A_imag
        dt = jnp.exp(self.log_dt)
        dtA = A * dt[:, None]
        K = dtA[:, :, None] * jnp.arange(L, dtype=jnp.float32)
        C = (self.C_re + 1j * self.C_im) * (jnp.exp(dtA) - 1.0) / A
        return 2.0 * jnp.einsum('hn,hnl->hl', C, jnp.exp(K)).real


if __name__ == "__main__":
    d_model, N, L = 32, 64, 256
    mod = S4DKernelParams(d_model, N=N, key=jax.random.PRNGKey(0))

    k = jax.block_until_ready(mod.forward(L))
    assert k.shape == (d_model, L) and k.dtype == jnp.float32

    k_ref = jax.block_until_ready(mod.forward_ref(L))
    err = float(jnp.max(jnp.abs(k - k_ref)))
    scale = float(jnp.max(jnp.abs(k_ref)))
    if err <= 1e-3 * max(scale, 1.0) + 1e-4:
        print("KERNEL_OK")
    else:
        print(f"MISMATCH max_abs_err={err} scale={scale}")
</pallas_src>

<mosaic_0001>
module attributes {stable_mosaic.version = 11 : i64} {
  func.func @_s4d_mm_kernel(%arg0: i32, %arg1: i32, %arg2: memref<32x2x64xf32, #tpu.memory_space<vmem>>, %arg3: memref<32x64x128xf32, #tpu.memory_space<vmem>>, %arg4: memref<32x2x128xf32, #tpu.memory_space<vmem>>) attributes {dimension_semantics = [#tpu.dimension_semantics<parallel>, #tpu.dimension_semantics<parallel>], iteration_bounds = array<i64: 1, 1>, scalar_prefetch = 0 : i64, scratch_operands = 0 : i64, tpu.core_type = #tpu.core_type<tc>, window_params = [{transform_indices = @transform_0, window_bounds = array<i64: 32, 2, 64>}, {transform_indices = @transform_1, window_bounds = array<i64: 32, 64, 128>}, {transform_indices = @transform_2, window_bounds = array<i64: 32, 2, 128>}]} {
    %c0 = arith.constant 0 : index
    %c0_0 = arith.constant 0 : index
    %c0_1 = arith.constant 0 : index
    %0 = vector.load %arg2[%c0, %c0_0, %c0_1] : memref<32x2x64xf32, #tpu.memory_space<vmem>>, vector<32x2x64xf32>
    %c0_2 = arith.constant 0 : index
    %c0_3 = arith.constant 0 : index
    %c0_4 = arith.constant 0 : index
    %1 = vector.load %arg3[%c0_2, %c0_3, %c0_4] : memref<32x64x128xf32, #tpu.memory_space<vmem>>, vector<32x64x128xf32>
    "tpu.trace_start"() <{level = 10 : i32, message = "han,hnb->hab"}> : () -> ()
    %cst = arith.constant dense<0.000000e+00> : vector<32x2x128xf32>
    %2 = tpu.matmul %0, %1, %cst {dimension_numbers = #tpu.dot_dimension_numbers<[2], [1], [1], [2], [0, 0, 0, 1, 1, 2], [0], [0]>} : vector<32x2x64xf32>, vector<32x64x128xf32>, vector<32x2x128xf32> -> vector<32x2x128xf32>
    "tpu.trace_stop"() : () -> ()
    %c0_5 = arith.constant 0 : index
    %c0_6 = arith.constant 0 : index
    %c0_7 = arith.constant 0 : index
    %3 = vector.load %arg4[%c0_5, %c0_6, %c0_7] : memref<32x2x128xf32, #tpu.memory_space<vmem>>, vector<32x2x128xf32>
    tpu.vector_store %arg4[%c0_5, %c0_6, %c0_7], %2 {strides = array<i32>} : memref<32x2x128xf32, #tpu.memory_space<vmem>>, vector<32x2x128xf32>,
    return
  }
  func.func @transform_0(%arg0: i32, %arg1: i32) -> (i32, i32, i32) {
    %c0_i32 = arith.constant 0 : i32
    %c0_i32_0 = arith.constant 0 : i32
    return %arg0, %arg1, %c0_i32 : i32, i32, i32
  }
  func.func @transform_1(%arg0: i32, %arg1: i32) -> (i32, i32, i32) {
    %c0_i32 = arith.constant 0 : i32
    %c0_i32_0 = arith.constant 0 : i32
    %c0_i32_1 = arith.constant 0 : i32
    return %arg0, %c0_i32, %c0_i32_0 : i32, i32, i32
  }
  func.func @transform_2(%arg0: i32, %arg1: i32) -> (i32, i32, i32) {
    %c0_i32 = arith.constant 0 : i32
    %c0_i32_0 = arith.constant 0 : i32
    return %arg0, %arg1, %c0_i32 : i32, i32, i32
  }
}

</mosaic_0001>

<llo_original>
// kernel: tpu_custom_call.1
$region0: #{tpu_custom_call.1}
  #allocation0 [shape = 'u32[]', space=smem, size = 0x4, offset = 0x4, fixed_abs, tag = 'smem constant byte address 0x4 - core index']
  #allocation1 [shape = 'u32[144,128]{1,0:T(1,128)}', space=vmem, size = 0x12000, scoped, tag = 'internal scratch']
  %s0 = inlined_call_operand.hbm [shape: f32[32,2,64], index: 0, kind: input, shape index: {}]
  %s1 = inlined_call_operand.hbm [shape: f32[32,64,128], index: 1, kind: input, shape index: {}]
  %s2 = inlined_call_operand.hbm [shape: f32[32,2,128], index: 2, kind: output, shape index: {}]
  %s3 = sld [smem:[#allocation0]]
  $region26: #{tpu_custom_call.1} parent=0
    _
  %s5 = ssub.s32 1, %s3
  %s6 = scalar_select 0, %s5, %s3
  $region1: #{tpu_custom_call.1} parent=0
    #allocation2 [shape = 'u8[32768]{0}', space=vmem, size = 0x8000, scoped, tag = 'input window, operand 0, single buffered']
    #allocation3 [shape = 's32[1]{0}', space=sflag, size = 0x4, scoped, tag = 'scoped memory for tpu_custom_call.1']
    #allocation4 [shape = 's32[1]{0}', space=sflag, size = 0x4, scoped, tag = 'scoped memory for tpu_custom_call.1']
    #allocation5 [shape = 'u8[1048576]{0}', space=vmem, size = 0x100000, scoped, tag = 'input window, operand 1, single buffered']
    #allocation6 [shape = 's32[1]{0}', space=sflag, size = 0x4, scoped, tag = 'scoped memory for tpu_custom_call.1']
    #allocation7 [shape = 'u8[32768]{0}', space=vmem, size = 0x8000, scoped, tag = 'output window, operand 0, single buffered']
    %7 = vsyncpa [#allocation3], 0
    %8 = vsyncpa [#allocation6], 0
    %9 = vsyncpa [#allocation4], 0
    // Predicated region
    $region2: #{tpu_custom_call.1} parent=1 // pred_check
      _
    $region3: #{tpu_custom_call.1} parent=1 // pred_check_branch
      %11 = sbr.rel (0) target = $region5
    $region4: #{tpu_custom_call.1} parent=1 // pred_region
      %s13 = ssub.s32 1024, 1024
      %14 = vsyncadd [#allocation3], %s13
      %s15 = sshll.u32 [#allocation2], 4
      %s16 = int_to_ptr.vmem [resolvable:$true] %s15
      %21 = dma.hbm_to_vmem [thread:$0]  %s0, 1024, %s16, [#allocation3], 32, 32, 2
    $region5: #{tpu_custom_call.1} parent=1 // pred_fallthru
      _
    // Predicated region
    $region6: #{tpu_custom_call.1} parent=1 // pred_check
      _
    $region7: #{tpu_custom_call.1} parent=1 // pred_check_branch
      %23 = sbr.rel (0) target = $region9
    $region8: #{tpu_custom_call.1} parent=1 // pred_region
      %s25 = ssub.s32 32768, 32768
      %26 = vsyncadd [#allocation6], %s25
      %s27 = sshll.u32 [#allocation5], 4
      %s28 = int_to_ptr.vmem [resolvable:$true] %s27
      %33 = dma.hbm_to_vmem [thread:$0]  %s1, 32768, %s28, [#allocation6], 128, 128, 8
    $region9: #{tpu_custom_call.1} parent=1 // pred_fallthru
      _
    // Predicated region
    $region10: #{tpu_custom_call.1} parent=1 // pred_check
      _
    $region11: #{tpu_custom_call.1} parent=1 // pred_check_branch
      %35 = sbr.rel (0) target = $region13
    $region12: #{tpu_custom_call.1} parent=1 // pred_region
      %36 = dma.done [#allocation3], 1024
    $region13: #{tpu_custom_call.1} parent=1 // pred_fallthru
      _
    // Predicated region
    $region14: #{tpu_custom_call.1} parent=1 // pred_check
      _
    $region15: #{tpu_custom_call.1} parent=1 // pred_check_branch
      %38 = sbr.rel (0) target = $region17
    $region16: #{tpu_custom_call.1} parent=1 // pred_region
      %39 = dma.done [#allocation6], 32768
    $region17: #{tpu_custom_call.1} parent=1 // pred_fallthru
      _
    %v40 = vld [vmem:[#allocation2] sm:$0x3]
    %v41 = vld [vmem:[#allocation2 + $0x2] sm:$0x3]
    %v42 = vld [vmem:[#allocation2 + $0x4] sm:$0x3]
    %v43 = vld [vmem:[#allocation2 + $0x6] sm:$0x3]
    %v44 = vld [vmem:[#allocation2 + $0x8] sm:$0x3]
    %v45 = vld [vmem:[#allocation2 + $0xa] sm:$0x3]
    %v46 = vld [vmem:[#allocation2 + $0xc] sm:$0x3]
    %v47 = vld [vmem:[#allocation2 + $0xe] sm:$0x3]
    %v48 = vld [vmem:[#allocation2 + $0x10] sm:$0x3]
    %v49 = vld [vmem:[#allocation2 + $0x12] sm:$0x3]
    %v50 = vld [vmem:[#allocation2 + $0x14] sm:$0x3]
    %v51 = vld [vmem:[#allocation2 + $0x16] sm:$0x3]
    %v52 = vld [vmem:[#allocation2 + $0x18] sm:$0x3]
    %v53 = vld [vmem:[#allocation2 + $0x1a] sm:$0x3]
    %v54 = vld [vmem:[#allocation2 + $0x1c] sm:$0x3]
    %v55 = vld [vmem:[#allocation2 + $0x1e] sm:$0x3]
    %v56 = vld [vmem:[#allocation2 + $0x20] sm:$0x3]
    %v57 = vld [vmem:[#allocation2 + $0x22] sm:$0x3]
    %v58 = vld [vmem:[#allocation2 + $0x24] sm:$0x3]
    %v59 = vld [vmem:[#allocation2 + $0x26] sm:$0x3]
    %v60 = vld [vmem:[#allocation2 + $0x28] sm:$0x3]
    %v61 = vld [vmem:[#allocation2 + $0x2a] sm:$0x3]
    %v62 = vld [vmem:[#allocation2 + $0x2c] sm:$0x3]
    %v63 = vld [vmem:[#allocation2 + $0x2e] sm:$0x3]
    %v64 = vld [vmem:[#allocation2 + $0x30] sm:$0x3]
    %v65 = vld [vmem:[#allocation2 + $0x32] sm:$0x3]
    %v66 = vld [vmem:[#allocation2 + $0x34] sm:$0x3]
    %v67 = vld [vmem:[#allocation2 + $0x36] sm:$0x3]
    %v68 = vld [vmem:[#allocation2 + $0x38] sm:$0x3]
    %v69 = vld [vmem:[#allocation2 + $0x3a] sm:$0x3]
    %v70 = vld [vmem:[#allocation2 + $0x3c] sm:$0x3]
    %v71 = vld [vmem:[#allocation2 + $0x3e] sm:$0x3]
    %v72 = vld [vmem:[#allocation5] sm:$0xff]
    %v73 = vld [vmem:[#allocation5 + $0x8] sm:$0xff]
    %v74 = vld [vmem:[#allocation5 + $0x10] sm:$0xff]
    %v75 = vld [vmem:[#allocation5 + $0x18] sm:$0xff]
    %v76 = vld [vmem:[#allocation5 + $0x20] sm:$0xff]
    %v77 = vld [vmem:[#allocation5 + $0x28] sm:$0xff]
    %v78 = vld [vmem:[#allocation5 + $0x30] sm:$0xff]
    %v79 = vld [vmem:[#allocation5 + $0x38] sm:$0xff]
    %v80 = vld [vmem:[#allocation5 + $0x40] sm:$0xff]
    %v81 = vld [vmem:[#allocation5 + $0x48] sm:$0xff]
    %v82 = vld [vmem:[#allocation5 + $0x50] sm:$0xff]
    %v83 = vld [vmem:[#allocation5 + $0x58] sm:$0xff]
    %v84 = vld [vmem:[#allocation5 + $0x60] sm:$0xff]
    %v85 = vld [vmem:[#allocation5 + $0x68] sm:$0xff]
    %v86 = vld [vmem:[#allocation5 + $0x70] sm:$0xff]
    %v87 = vld [vmem:[#allocation5 + $0x78] sm:$0xff]
    %v88 = vld [vmem:[#allocation5 + $0x80] sm:$0xff]
    %v89 = vld [vmem:[#allocation5 + $0x88] sm:$0xff]
    %v90 = vld [vmem:[#allocation5 + $0x90] sm:$0xff]
    %v91 = vld [vmem:[#allocation5 + $0x98] sm:$0xff]
    %v92 = vld [vmem:[#allocation5 + $0xa0] sm:$0xff]
    %v93 = vld [vmem:[#allocation5 + $0xa8] sm:$0xff]
    %v94 = vld [vmem:[#allocation5 + $0xb0] sm:$0xff]
    %v95 = vld [vmem:[#allocation5 + $0xb8] sm:$0xff]
    %v96 = vld [vmem:[#allocation5 + $0xc0] sm:$0xff]
    %v97 = vld [vmem:[#allocation5 + $0xc8] sm:$0xff]
    %v98 = vld [vmem:[#allocation5 + $0xd0] sm:$0xff]
    %v99 = vld [vmem:[#allocation5 + $0xd8] sm:$0xff]
    %v100 = vld [vmem:[#allocation5 + $0xe0] sm:$0xff]
    %v101 = vld [vmem:[#allocation5 + $0xe8] sm:$0xff]
    %v102 = vld [vmem:[#allocation5 + $0xf0] sm:$0xff]
    %v103 = vld [vmem:[#allocation5 + $0xf8] sm:$0xff]
    %v104 = vld [vmem:[#allocation5 + $0x100] sm:$0xff]
    %v105 = vld [vmem:[#allocation5 + $0x108] sm:$0xff]
    %v106 = vld [vmem:[#allocation5 + $0x110] sm:$0xff]
    %v107 = vld [vmem:[#allocation5 + $0x118] sm:$0xff]
    %v108 = vld [vmem:[#allocation5 + $0x120] sm:$0xff]
    %v109 = vld [vmem:[#allocation5 + $0x128] sm:$0xff]
    %v110 = vld [vmem:[#allocation5 + $0x130] sm:$0xff]
    %v111 = vld [vmem:[#allocation5 + $0x138] sm:$0xff]
    %v112 = vld [vmem:[#allocation5 + $0x140] sm:$0xff]
    %v113 = vld [vmem:[#allocation5 + $0x148] sm:$0xff]
    %v114 = vld [vmem:[#allocation5 + $0x150] sm:$0xff]
    %v115 = vld [vmem:[#allocation5 + $0x158] sm:$0xff]
    %v116 = vld [vmem:[#allocation5 + $0x160] sm:$0xff]
    %v117 = vld [vmem:[#allocation5 + $0x168] sm:$0xff]
    %v118 = vld [vmem:[#allocation5 + $0x170] sm:$0xff]
    %v119 = vld [vmem:[#allocation5 + $0x178] sm:$0xff]
    %v120 = vld [vmem:[#allocation5 + $0x180] sm:$0xff]
    %v121 = vld [vmem:[#allocation5 + $0x188] sm:$0xff]
    %v122 = vld [vmem:[#allocation5 + $0x190] sm:$0xff]
    %v123 = vld [vmem:[#allocation5 + $0x198] sm:$0xff]
    %v124 = vld [vmem:[#allocation5 + $0x1a0] sm:$0xff]
    %v125 = vld [vmem:[#allocation5 + $0x1a8] sm:$0xff]
    %v126 = vld [vmem:[#allocation5 + $0x1b0] sm:$0xff]
    %v127 = vld [vmem:[#allocation5 + $0x1b8] sm:$0xff]
    %v128 = vld [vmem:[#allocation5 + $0x1c0] sm:$0xff]
    %v129 = vld [vmem:[#allocation5 + $0x1c8] sm:$0xff]
    %v130 = vld [vmem:[#allocation5 + $0x1d0] sm:$0xff]
    %v131 = vld [vmem:[#allocation5 + $0x1d8] sm:$0xff]
    %v132 = vld [vmem:[#allocation5 + $0x1e0] sm:$0xff]
    %v133 = vld [vmem:[#allocation5 + $0x1e8] sm:$0xff]
    %v134 = vld [vmem:[#allocation5 + $0x1f0] sm:$0xff]
    %v135 = vld [vmem:[#allocation5 + $0x1f8] sm:$0xff]
    %v136 = vld [vmem:[#allocation5 + $0x200] sm:$0xff]
    %v137 = vld [vmem:[#allocation5 + $0x208] sm:$0xff]
    %v138 = vld [vmem:[#allocation5 + $0x210] sm:$0xff]
    %v139 = vld [vmem:[#allocation5 + $0x218] sm:$0xff]
    %v140 = vld [vmem:[#allocation5 + $0x220] sm:$0xff]
    %v141 = vld [vmem:[#allocation5 + $0x228] sm:$0xff]
    %v142 = vld [vmem:[#allocation5 + $0x230] sm:$0xff]
    %v143 = vld [vmem:[#allocation5 + $0x238] sm:$0xff]
    %v144 = vld [vmem:[#allocation5 + $0x240] sm:$0xff]
    %v145 = vld [vmem:[#allocation5 + $0x248] sm:$0xff]
    %v146 = vld [vmem:[#allocation5 + $0x250] sm:$0xff]
    %v147 = vld [vmem:[#allocation5 + $0x258] sm:$0xff]
    %v148 = vld [vmem:[#allocation5 + $0x260] sm:$0xff]
    %v149 = vld [vmem:[#allocation5 + $0x268] sm:$0xff]
    %v150 = vld [vmem:[#allocation5 + $0x270] sm:$0xff]
    %v151 = vld [vmem:[#allocation5 + $0x278] sm:$0xff]
    %v152 = vld [vmem:[#allocation5 + $0x280] sm:$0xff]
    %v153 = vld [vmem:[#allocation5 + $0x288] sm:$0xff]
    %v154 = vld [vmem:[#allocation5 + $0x290] sm:$0xff]
    %v155 = vld [vmem:[#allocation5 + $0x298] sm:$0xff]
    %v156 = vld [vmem:[#allocation5 + $0x2a0] sm:$0xff]
    %v157 = vld [vmem:[#allocation5 + $0x2a8] sm:$0xff]
    %v158 = vld [vmem:[#allocation5 + $0x2b0] sm:$0xff]
    %v159 = vld [vmem:[#allocation5 + $0x2b8] sm:$0xff]
    %v160 = vld [vmem:[#allocation5 + $0x2c0] sm:$0xff]
    %v161 = vld [vmem:[#allocation5 + $0x2c8] sm:$0xff]
    %v162 = vld [vmem:[#allocation5 + $0x2d0] sm:$0xff]
    %v163 = vld [vmem:[#allocation5 + $0x2d8] sm:$0xff]
    %v164 = vld [vmem:[#allocation5 + $0x2e0] sm:$0xff]
    %v165 = vld [vmem:[#allocation5 + $0x2e8] sm:$0xff]
    %v166 = vld [vmem:[#allocation5 + $0x2f0] sm:$0xff]
    %v167 = vld [vmem:[#allocation5 + $0x2f8] sm:$0xff]
    %v168 = vld [vmem:[#allocation5 + $0x300] sm:$0xff]
    %v169 = vld [vmem:[#allocation5 + $0x308] sm:$0xff]
    %v170 = vld [vmem:[#allocation5 + $0x310] sm:$0xff]
    %v171 = vld [vmem:[#allocation5 + $0x318] sm:$0xff]
    %v172 = vld [vmem:[#allocation5 + $0x320] sm:$0xff]
    %v173 = vld [vmem:[#allocation5 + $0x328] sm:$0xff]
    %v174 = vld [vmem:[#allocation5 + $0x330] sm:$0xff]
    %v175 = vld [vmem:[#allocation5 + $0x338] sm:$0xff]
    %v176 = vld [vmem:[#allocation5 + $0x340] sm:$0xff]
    %v177 = vld [vmem:[#allocation5 + $0x348] sm:$0xff]
    %v178 = vld [vmem:[#allocation5 + $0x350] sm:$0xff]
    %v179 = vld [vmem:[#allocation5 + $0x358] sm:$0xff]
    %v180 = vld [vmem:[#allocation5 + $0x360] sm:$0xff]
    %v181 = vld [vmem:[#allocation5 + $0x368] sm:$0xff]
    %v182 = vld [vmem:[#allocation5 + $0x370] sm:$0xff]
    %v183 = vld [vmem:[#allocation5 + $0x378] sm:$0xff]
    %v184 = vld [vmem:[#allocation5 + $0x380] sm:$0xff]
    %v185 = vld [vmem:[#allocation5 + $0x388] sm:$0xff]
    %v186 = vld [vmem:[#allocation5 + $0x390] sm:$0xff]
    %v187 = vld [vmem:[#allocation5 + $0x398] sm:$0xff]
    %v188 = vld [vmem:[#allocation5 + $0x3a0] sm:$0xff]
    %v189 = vld [vmem:[#allocation5 + $0x3a8] sm:$0xff]
    %v190 = vld [vmem:[#allocation5 + $0x3b0] sm:$0xff]
    %v191 = vld [vmem:[#allocation5 + $0x3b8] sm:$0xff]
    %v192 = vld [vmem:[#allocation5 + $0x3c0] sm:$0xff]
    %v193 = vld [vmem:[#allocation5 + $0x3c8] sm:$0xff]
    %v194 = vld [vmem:[#allocation5 + $0x3d0] sm:$0xff]
    %v195 = vld [vmem:[#allocation5 + $0x3d8] sm:$0xff]
    %v196 = vld [vmem:[#allocation5 + $0x3e0] sm:$0xff]
    %v197 = vld [vmem:[#allocation5 + $0x3e8] sm:$0xff]
    %v198 = vld [vmem:[#allocation5 + $0x3f0] sm:$0xff]
    %v199 = vld [vmem:[#allocation5 + $0x3f8] sm:$0xff]
    %v200 = vld [vmem:[#allocation5 + $0x400] sm:$0xff]
    %v201 = vld [vmem:[#allocation5 + $0x408] sm:$0xff]
    %v202 = vld [vmem:[#allocation5 + $0x410] sm:$0xff]
    %v203 = vld [vmem:[#allocation5 + $0x418] sm:$0xff]
    %v204 = vld [vmem:[#allocation5 + $0x420] sm:$0xff]
    %v205 = vld [vmem:[#allocation5 + $0x428] sm:$0xff]
    %v206 = vld [vmem:[#allocation5 + $0x430] sm:$0xff]
    %v207 = vld [vmem:[#allocation5 + $0x438] sm:$0xff]
    %v208 = vld [vmem:[#allocation5 + $0x440] sm:$0xff]
    %v209 = vld [vmem:[#allocation5 + $0x448] sm:$0xff]
    %v210 = vld [vmem:[#allocation5 + $0x450] sm:$0xff]
    %v211 = vld [vmem:[#allocation5 + $0x458] sm:$0xff]
    %v212 = vld [vmem:[#allocation5 + $0x460] sm:$0xff]
    %v213 = vld [vmem:[#allocation5 + $0x468] sm:$0xff]
    %v214 = vld [vmem:[#allocation5 + $0x470] sm:$0xff]
    %v215 = vld [vmem:[#allocation5 + $0x478] sm:$0xff]
    %v216 = vld [vmem:[#allocation5 + $0x480] sm:$0xff]
    %v217 = vld [vmem:[#allocation5 + $0x488] sm:$0xff]
    %v218 = vld [vmem:[#allocation5 + $0x490] sm:$0xff]
    %v219 = vld [vmem:[#allocation5 + $0x498] sm:$0xff]
    %v220 = vld [vmem:[#allocation5 + $0x4a0] sm:$0xff]
    %v221 = vld [vmem:[#allocation5 + $0x4a8] sm:$0xff]
    %v222 = vld [vmem:[#allocation5 + $0x4b0] sm:$0xff]
    %v223 = vld [vmem:[#allocation5 + $0x4b8] sm:$0xff]
    %v224 = vld [vmem:[#allocation5 + $0x4c0] sm:$0xff]
    %v225 = vld [vmem:[#allocation5 + $0x4c8] sm:$0xff]
    %v226 = vld [vmem:[#allocation5 + $0x4d0] sm:$0xff]
    %v227 = vld [vmem:[#allocation5 + $0x4d8] sm:$0xff]
    %v228 = vld [vmem:[#allocation5 + $0x4e0] sm:$0xff]
    %v229 = vld [vmem:[#allocation5 + $0x4e8] sm:$0xff]
    %v230 = vld [vmem:[#allocation5 + $0x4f0] sm:$0xff]
    %v231 = vld [vmem:[#allocation5 + $0x4f8] sm:$0xff]
    %v232 = vld [vmem:[#allocation5 + $0x500] sm:$0xff]
    %v233 = vld [vmem:[#allocation5 + $0x508] sm:$0xff]
    %v234 = vld [vmem:[#allocation5 + $0x510] sm:$0xff]
    %v235 = vld [vmem:[#allocation5 + $0x518] sm:$0xff]
    %v236 = vld [vmem:[#allocation5 + $0x520] sm:$0xff]
    %v237 = vld [vmem:[#allocation5 + $0x528] sm:$0xff]
    %v238 = vld [vmem:[#allocation5 + $0x530] sm:$0xff]
    %v239 = vld [vmem:[#allocation5 + $0x538] sm:$0xff]
    %v240 = vld [vmem:[#allocation5 + $0x540] sm:$0xff]
    %v241 = vld [vmem:[#allocation5 + $0x548] sm:$0xff]
    %v242 = vld [vmem:[#allocation5 + $0x550] sm:$0xff]
    %v243 = vld [vmem:[#allocation5 + $0x558] sm:$0xff]
    %v244 = vld [vmem:[#allocation5 + $0x560] sm:$0xff]
    %v245 = vld [vmem:[#allocation5 + $0x568] sm:$0xff]
    %v246 = vld [vmem:[#allocation5 + $0x570] sm:$0xff]
    %v247 = vld [vmem:[#allocation5 + $0x578] sm:$0xff]
    %v248 = vld [vmem:[#allocation5 + $0x580] sm:$0xff]
    %v249 = vld [vmem:[#allocation5 + $0x588] sm:$0xff]
    %v250 = vld [vmem:[#allocation5 + $0x590] sm:$0xff]
    %v251 = vld [vmem:[#allocation5 + $0x598] sm:$0xff]
    %v252 = vld [vmem:[#allocation5 + $0x5a0] sm:$0xff]
    %v253 = vld [vmem:[#allocation5 + $0x5a8] sm:$0xff]
    %v254 = vld [vmem:[#allocation5 + $0x5b0] sm:$0xff]
    %v255 = vld [vmem:[#allocation5 + $0x5b8] sm:$0xff]
    %v256 = vld [vmem:[#allocation5 + $0x5c0] sm:$0xff]
    %v257 = vld [vmem:[#allocation5 + $0x5c8] sm:$0xff]
    %v258 = vld [vmem:[#allocation5 + $0x5d0] sm:$0xff]
    %v259 = vld [vmem:[#allocation5 + $0x5d8] sm:$0xff]
    %v260 = vld [vmem:[#allocation5 + $0x5e0] sm:$0xff]
    %v261 = vld [vmem:[#allocation5 + $0x5e8] sm:$0xff]
    %v262 = vld [vmem:[#allocation5 + $0x5f0] sm:$0xff]
    %v263 = vld [vmem:[#allocation5 + $0x5f8] sm:$0xff]
    %v264 = vld [vmem:[#allocation5 + $0x600] sm:$0xff]
    %v265 = vld [vmem:[#allocation5 + $0x608] sm:$0xff]
    %v266 = vld [vmem:[#allocation5 + $0x610] sm:$0xff]
    %v267 = vld [vmem:[#allocation5 + $0x618] sm:$0xff]
    %v268 = vld [vmem:[#allocation5 + $0x620] sm:$0xff]
    %v269 = vld [vmem:[#allocation5 + $0x628] sm:$0xff]
    %v270 = vld [vmem:[#allocation5 + $0x630] sm:$0xff]
    %v271 = vld [vmem:[#allocation5 + $0x638] sm:$0xff]
    %v272 = vld [vmem:[#allocation5 + $0x640] sm:$0xff]
    %v273 = vld [vmem:[#allocation5 + $0x648] sm:$0xff]
    %v274 = vld [vmem:[#allocation5 + $0x650] sm:$0xff]
    %v275 = vld [vmem:[#allocation5 + $0x658] sm:$0xff]
    %v276 = vld [vmem:[#allocation5 + $0x660] sm:$0xff]
    %v277 = vld [vmem:[#allocation5 + $0x668] sm:$0xff]
    %v278 = vld [vmem:[#allocation5 + $0x670] sm:$0xff]
    %v279 = vld [vmem:[#allocation5 + $0x678] sm:$0xff]
    %v280 = vld [vmem:[#allocation5 + $0x680] sm:$0xff]
    %v281 = vld [vmem:[#allocation5 + $0x688] sm:$0xff]
    %v282 = vld [vmem:[#allocation5 + $0x690] sm:$0xff]
    %v283 = vld [vmem:[#allocation5 + $0x698] sm:$0xff]
    %v284 = vld [vmem:[#allocation5 + $0x6a0] sm:$0xff]
    %v285 = vld [vmem:[#allocation5 + $0x6a8] sm:$0xff]
    %v286 = vld [vmem:[#allocation5 + $0x6b0] sm:$0xff]
    %v287 = vld [vmem:[#allocation5 + $0x6b8] sm:$0xff]
    %v288 = vld [vmem:[#allocation5 + $0x6c0] sm:$0xff]
    %v289 = vld [vmem:[#allocation5 + $0x6c8] sm:$0xff]
    %v290 = vld [vmem:[#allocation5 + $0x6d0] sm:$0xff]
    %v291 = vld [vmem:[#allocation5 + $0x6d8] sm:$0xff]
    %v292 = vld [vmem:[#allocation5 + $0x6e0] sm:$0xff]
    %v293 = vld [vmem:[#allocation5 + $0x6e8] sm:$0xff]
    %v294 = vld [vmem:[#allocation5 + $0x6f0] sm:$0xff]
    %v295 = vld [vmem:[#allocation5 + $0x6f8] sm:$0xff]
    %v296 = vld [vmem:[#allocation5 + $0x700] sm:$0xff]
    %v297 = vld [vmem:[#allocation5 + $0x708] sm:$0xff]
    %v298 = vld [vmem:[#allocation5 + $0x710] sm:$0xff]
    %v299 = vld [vmem:[#allocation5 + $0x718] sm:$0xff]
    %v300 = vld [vmem:[#allocation5 + $0x720] sm:$0xff]
    %v301 = vld [vmem:[#allocation5 + $0x728] sm:$0xff]
    %v302 = vld [vmem:[#allocation5 + $0x730] sm:$0xff]
    %v303 = vld [vmem:[#allocation5 + $0x738] sm:$0xff]
    %v304 = vld [vmem:[#allocation5 + $0x740] sm:$0xff]
    %v305 = vld [vmem:[#allocation5 + $0x748] sm:$0xff]
    %v306 = vld [vmem:[#allocation5 + $0x750] sm:$0xff]
    %v307 = vld [vmem:[#allocation5 + $0x758] sm:$0xff]
    %v308 = vld [vmem:[#allocation5 + $0x760] sm:$0xff]
    %v309 = vld [vmem:[#allocation5 + $0x768] sm:$0xff]
    %v310 = vld [vmem:[#allocation5 + $0x770] sm:$0xff]
    %v311 = vld [vmem:[#allocation5 + $0x778] sm:$0xff]
    %v312 = vld [vmem:[#allocation5 + $0x780] sm:$0xff]
    %v313 = vld [vmem:[#allocation5 + $0x788] sm:$0xff]
    %v314 = vld [vmem:[#allocation5 + $0x790] sm:$0xff]
    %v315 = vld [vmem:[#allocation5 + $0x798] sm:$0xff]
    %v316 = vld [vmem:[#allocation5 + $0x7a0] sm:$0xff]
    %v317 = vld [vmem:[#allocation5 + $0x7a8] sm:$0xff]
    %v318 = vld [vmem:[#allocation5 + $0x7b0] sm:$0xff]
    %v319 = vld [vmem:[#allocation5 + $0x7b8] sm:$0xff]
    %v320 = vld [vmem:[#allocation5 + $0x7c0] sm:$0xff]
    %v321 = vld [vmem:[#allocation5 + $0x7c8] sm:$0xff]
    %v322 = vld [vmem:[#allocation5 + $0x7d0] sm:$0xff]
    %v323 = vld [vmem:[#allocation5 + $0x7d8] sm:$0xff]
    %v324 = vld [vmem:[#allocation5 + $0x7e0] sm:$0xff]
    %v325 = vld [vmem:[#allocation5 + $0x7e8] sm:$0xff]
    %v326 = vld [vmem:[#allocation5 + $0x7f0] sm:$0xff]
    %v327 = vld [vmem:[#allocation5 + $0x7f8] sm:$0xff]
    %vm328 = vcmask 523264
    %v330 = vsel %vm328, %v40, 0
    %332 = vmatprep.subr.mxu0 0.0
    %333 = vmatpush1.msra.mxu0 %v72
    %334 = vmatprep.subr.mxu0 0.0
    %335 = vmatpush1.msra.mxu0 %v73
    %336 = vmatprep.subr.mxu0 0.0
    %337 = vmatpush1.msra.mxu0 %v74
    %338 = vmatprep.subr.mxu0 0.0
    %339 = vmatpush1.msra.mxu0 %v75
    %340 = vmatprep.subr.mxu0 0.0
    %341 = vmatpush1.msra.mxu0 %v76
    %342 = vmatprep.subr.mxu0 0.0
    %343 = vmatpush1.msra.mxu0 %v77
    %344 = vmatprep.subr.mxu0 0.0
    %345 = vmatpush1.msra.mxu0 %v78
    %346 = vmatprep.subr.mxu0 0.0
    %347 = vmatpush1.msra.mxu0 %v79
    %348 = vmatprep.subr.mxu0 0.0
    %349 = vmatpush1.msra.mxu0 0.0
    %350 = vmatprep.subr.mxu0 0.0
    %351 = vmatpush1.msra.mxu0 0.0
    %352 = vmatprep.subr.mxu0 0.0
    %353 = vmatpush1.msra.mxu0 0.0
    %354 = vmatprep.subr.mxu0 0.0
    %355 = vmatpush1.msra.mxu0 0.0
    %356 = vmatprep.subr.mxu0 0.0
    %357 = vmatpush1.msra.mxu0 0.0
    %358 = vmatprep.subr.mxu0 0.0
    %359 = vmatpush1.msra.mxu0 0.0
    %360 = vmatprep.subr.mxu0 0.0
    %361 = vmatpush1.msra.mxu0 0.0
    %362 = vmatprep.subr.mxu0 0.0
    %363 = vmatpush1.msra.mxu0 0.0
    %364 = vmatprep.subr.mxu0 0.0
    %365 = vmatpush1.msra.mxu0 0.0
    %366 = vmatprep.subr.mxu0 0.0
    %367 = vmatpush1.msra.mxu0 0.0
    %368 = vmatprep.subr.mxu0 0.0
    %369 = vmatpush1.msra.mxu0 0.0
    %370 = vmatprep.subr.mxu0 0.0
    %371 = vmatpush1.msra.mxu0 0.0
    %372 = vmatprep.subr.mxu0 0.0
    %373 = vmatpush1.msra.mxu0 0.0
    %374 = vmatprep.subr.mxu0 0.0
    %375 = vmatpush1.msra.mxu0 0.0
    %376 = vmatprep.subr.mxu0 0.0
    %377 = vmatpush1.msra.mxu0 0.0
    %378 = vmatprep.subr.mxu0 0.0
    %379 = vmatpush1.msra.mxu0 0.0
    %380 = vmatprep.subr.mxu0 0.0
    %381 = vmatpush1.msra.mxu0 0.0
    %382 = vmatprep.subr.mxu0 0.0
    %383 = vmatpush1.msra.mxu0 0.0
    %384 = vmatprep.subr.mxu0 0.0
    %385 = vmatpush1.msra.mxu0 0.0
    %386 = vmatprep.subr.mxu0 0.0
    %387 = vmatpush1.msra.mxu0 0.0
    %388 = vmatprep.subr.mxu0 0.0
    %389 = vmatpush1.msra.mxu0 0.0
    %390 = vmatprep.subr.mxu0 0.0
    %391 = vmatpush1.msra.mxu0 0.0
    %392 = vmatprep.subr.mxu0 0.0
    %393 = vmatpush1.msra.mxu0 0.0
    %394 = vmatprep.subr.mxu0 0.0
    %395 = vmatpush1.msra.mxu0 0.0
    %396 = vmatprep.mubr.f32.mxu0 0.0
    %397 = vmatmul.mubr.f32.gmra.mrb[0].mxu0 %v330
    %v398 = vpop.f32.mrb[0].mxu0
    %v399 = vadd.f32 0.0, %v398
    %v400 = vpop.f32.mrb[0].mxu0
    %401 = vdwg.mxu0
    %v403 = vsel %vm328, %v41, 0
    %405 = vmatprep.subr.mxu0 0.0
    %406 = vmatpush1.msra.mxu0 %v80
    %407 = vmatprep.subr.mxu0 0.0
    %408 = vmatpush1.msra.mxu0 %v81
    %409 = vmatprep.subr.mxu0 0.0
    %410 = vmatpush1.msra.mxu0 %v82
    %411 = vmatprep.subr.mxu0 0.0
    %412 = vmatpush1.msra.mxu0 %v83
    %413 = vmatprep.subr.mxu0 0.0
    %414 = vmatpush1.msra.mxu0 %v84
    %415 = vmatprep.subr.mxu0 0.0
    %416 = vmatpush1.msra.mxu0 %v85
    %417 = vmatprep.subr.mxu0 0.0
    %418 = vmatpush1.msra.mxu0 %v86
    %419 = vmatprep.subr.mxu0 0.0
    %420 = vmatpush1.msra.mxu0 %v87
    %421 = vmatprep.subr.mxu0 0.0
    %422 = vmatpush1.msra.mxu0 0.0
    %423 = vmatprep.subr.mxu0 0.0
    %424 = vmatpush1.msra.mxu0 0.0
    %425 = vmatprep.subr.mxu0 0.0
    %426 = vmatpush1.msra.mxu0 0.0
    %427 = vmatprep.subr.mxu0 0.0
    %428 = vmatpush1.msra.mxu0 0.0
    %429 = vmatprep.subr.mxu0 0.0
    %430 = vmatpush1.msra.mxu0 0.0
    %431 = vmatprep.subr.mxu0 0.0
    %432 = vmatpush1.msra.mxu0 0.0
    %433 = vmatprep.subr.mxu0 0.0
    %434 = vmatpush1.msra.mxu0 0.0
    %435 = vmatprep.subr.mxu0 0.0
    %436 = vmatpush1.msra.mxu0 0.0
    %437 = vmatprep.subr.mxu0 0.0
    %438 = vmatpush1.msra.mxu0 0.0
    %439 = vmatprep.subr.mxu0 0.0
    %440 = vmatpush1.msra.mxu0 0.0
    %441 = vmatprep.subr.mxu0 0.0
    %442 = vmatpush1.msra.mxu0 0.0
    %443 = vmatprep.subr.mxu0 0.0
    %444 = vmatpush1.msra.mxu0 0.0
    %445 = vmatprep.subr.mxu0 0.0
    %446 = vmatpush1.msra.mxu0 0.0
    %447 = vmatprep.subr.mxu0 0.0
    %448 = vmatpush1.msra.mxu0 0.0
    %449 = vmatprep.subr.mxu0 0.0
    %450 = vmatpush1.msra.mxu0 0.0
    %451 = vmatprep.subr.mxu0 0.0
    %452 = vmatpush1.msra.mxu0 0.0
    %453 = vmatprep.subr.mxu0 0.0
    %454 = vmatpush1.msra.mxu0 0.0
    %455 = vmatprep.subr.mxu0 0.0
    %456 = vmatpush1.msra.mxu0 0.0
    %457 = vmatprep.subr.mxu0 0.0
    %458 = vmatpush1.msra.mxu0 0.0
    %459 = vmatprep.subr.mxu0 0.0
    %460 = vmatpush1.msra.mxu0 0.0
    %461 = vmatprep.subr.mxu0 0.0
    %462 = vmatpush1.msra.mxu0 0.0
    %463 = vmatprep.subr.mxu0 0.0
    %464 = vmatpush1.msra.mxu0 0.0
    %465 = vmatprep.subr.mxu0 0.0
    %466 = vmatpush1.msra.mxu0 0.0
    %467 = vmatprep.subr.mxu0 0.0
    %468 = vmatpush1.msra.mxu0 0.0
    %469 = vmatprep.mubr.f32.mxu0 0.0
    %470 = vmatmul.mubr.f32.gmra.mrb[0].mxu0 %v403
    %v471 = vpop.f32.mrb[0].mxu0
    %v472 = vadd.f32 0.0, %v471
    %v473 = vpop.f32.mrb[0].mxu0
    %474 = vdwg.mxu0
    %v476 = vsel %vm328, %v42, 0
    %478 = vmatprep.subr.mxu0 0.0
    %479 = vmatpush1.msra.mxu0 %v88
    %480 = vmatprep.subr.mxu0 0.0
    %481 = vmatpush1.msra.mxu0 %v89
    %482 = vmatprep.subr.mxu0 0.0
    %483 = vmatpush1.msra.mxu0 %v90
    %484 = vmatprep.subr.mxu0 0.0
    %485 = vmatpush1.msra.mxu0 %v91
    %486 = vmatprep.subr.mxu0 0.0
    %487 = vmatpush1.msra.mxu0 %v92
    %488 = vmatprep.subr.mxu0 0.0
    %489 = vmatpush1.msra.mxu0 %v93
    %490 = vmatprep.subr.mxu0 0.0
    %491 = vmatpush1.msra.mxu0 %v94
    %492 = vmatprep.subr.mxu0 0.0
    %493 = vmatpush1.msra.mxu0 %v95
    %494 = vmatprep.subr.mxu0 0.0
    %495 = vmatpush1.msra.mxu0 0.0
    %496 = vmatprep.subr.mxu0 0.0
    %497 = vmatpush1.msra.mxu0 0.0
    %498 = vmatprep.subr.mxu0 0.0
    %499 = vmatpush1.msra.mxu0 0.0
    %500 = vmatprep.subr.mxu0 0.0
    %501 = vmatpush1.msra.mxu0 0.0
    %502 = vmatprep.subr.mxu0 0.0
    %503 = vmatpush1.msra.mxu0 0.0
    %504 = vmatprep.subr.mxu0 0.0
    %505 = vmatpush1.msra.mxu0 0.0
    %506 = vmatprep.subr.mxu0 0.0
    %507 = vmatpush1.msra.mxu0 0.0
    %508 = vmatprep.subr.mxu0 0.0
    %509 = vmatpush1.msra.mxu0 0.0
    %510 = vmatprep.subr.mxu0 0.0
    %511 = vmatpush1.msra.mxu0 0.0
    %512 = vmatprep.subr.mxu0 0.0
    %513 = vmatpush1.msra.mxu0 0.0
    %514 = vmatprep.subr.mxu0 0.0
    %515 = vmatpush1.msra.mxu0 0.0
    %516 = vmatprep.subr.mxu0 0.0
    %517 = vmatpush1.msra.mxu0 0.0
    %518 = vmatprep.subr.mxu0 0.0
    %519 = vmatpush1.msra.mxu0 0.0
    %520 = vmatprep.subr.mxu0 0.0
    %521 = vmatpush1.msra.mxu0 0.0
    %522 = vmatprep.subr.mxu0 0.0
    %523 = vmatpush1.msra.mxu0 0.0
    %524 = vmatprep.subr.mxu0 0.0
    %525 = vmatpush1.msra.mxu0 0.0
    %526 = vmatprep.subr.mxu0 0.0
    %527 = vmatpush1.msra.mxu0 0.0
    %528 = vmatprep.subr.mxu0 0.0
    %529 = vmatpush1.msra.mxu0 0.0
    %530 = vmatprep.subr.mxu0 0.0
    %531 = vmatpush1.msra.mxu0 0.0
    %532 = vmatprep.subr.mxu0 0.0
    %533 = vmatpush1.msra.mxu0 0.0
    %534 = vmatprep.subr.mxu0 0.0
    %535 = vmatpush1.msra.mxu0 0.0
    %536 = vmatprep.subr.mxu0 0.0
    %537 = vmatpush1.msra.mxu0 0.0
    %538 = vmatprep.subr.mxu0 0.0
    %539 = vmatpush1.msra.mxu0 0.0
    %540 = vmatprep.subr.mxu0 0.0
    %541 = vmatpush1.msra.mxu0 0.0
    %542 = vmatprep.mubr.f32.mxu0 0.0
    %543 = vmatmul.mubr.f32.gmra.mrb[0].mxu0 %v476
    %v544 = vpop.f32.mrb[0].mxu0
    %v545 = vadd.f32 0.0, %v544
    %v546 = vpop.f32.mrb[0].mxu0
    %547 = vdwg.mxu0
    %v549 = vsel %vm328, %v43, 0
    %551 = vmatprep.subr.mxu0 0.0
    %552 = vmatpush1.msra.mxu0 %v96
    %553 = vmatprep.subr.mxu0 0.0
    %554 = vmatpush1.msra.mxu0 %v97
    %555 = vmatprep.subr.mxu0 0.0
    %556 = vmatpush1.msra.mxu0 %v98
    %557 = vmatprep.subr.mxu0 0.0
    %558 = vmatpush1.msra.mxu0 %v99
    %559 = vmatprep.subr.mxu0 0.0
    %560 = vmatpush1.msra.mxu0 %v100
    %561 = vmatprep.subr.mxu0 0.0
    %562 = vmatpush1.msra.mxu0 %v101
    %563 = vmatprep.subr.mxu0 0.0
    %564 = vmatpush1.msra.mxu0 %v102
    %565 = vmatprep.subr.mxu0 0.0
    %566 = vmatpush1.msra.mxu0 %v103
    %567 = vmatprep.subr.mxu0 0.0
    %568 = vmatpush1.msra.mxu0 0.0
    %569 = vmatprep.subr.mxu0 0.0
    %570 = vmatpush1.msra.mxu0 0.0
    %571 = vmatprep.subr.mxu0 0.0
    %572 = vmatpush1.msra.mxu0 0.0
    %573 = vmatprep.subr.mxu0 0.0
    %574 = vmatpush1.msra.mxu0 0.0
    %575 = vmatprep.subr.mxu0 0.0
    %576 = vmatpush1.msra.mxu0 0.0
    %577 = vmatprep.subr.mxu0 0.0
    %578 = vmatpush1.msra.mxu0 0.0
    %579 = vmatprep.subr.mxu0 0.0
    %580 = vmatpush1.msra.mxu0 0.0
    %581 = vmatprep.subr.mxu0 0.0
    %582 = vmatpush1.msra.mxu0 0.0
    %583 = vmatprep.subr.mxu0 0.0
    %584 = vmatpush1.msra.mxu0 0.0
    %585 = vmatprep.subr.mxu0 0.0
    %586 = vmatpush1.msra.mxu0 0.0
    %587 = vmatprep.subr.mxu0 0.0
    %588 = vmatpush1.msra.mxu0 0.0
    %589 = vmatprep.subr.mxu0 0.0
    %590 = vmatpush1.msra.mxu0 0.0
    %591 = vmatprep.subr.mxu0 0.0
    %592 = vmatpush1.msra.mxu0 0.0
    %593 = vmatprep.subr.mxu0 0.0
    %594 = vmatpush1.msra.mxu0 0.0
    %595 = vmatprep.subr.mxu0 0.0
    %596 = vmatpush1.msra.mxu0 0.0
    %597 = vmatprep.subr.mxu0 0.0
    %598 = vmatpush1.msra.mxu0 0.0
    %599 = vmatprep.subr.mxu0 0.0
    %600 = vmatpush1.msra.mxu0 0.0
    %601 = vmatprep.subr.mxu0 0.0
    %602 = vmatpush1.msra.mxu0 0.0
    %603 = vmatprep.subr.mxu0 0.0
    %604 = vmatpush1.msra.mxu0 0.0
    %605 = vmatprep.subr.mxu0 0.0
    %606 = vmatpush1.msra.mxu0 0.0
    %607 = vmatprep.subr.mxu0 0.0
    %608 = vmatpush1.msra.mxu0 0.0
    %609 = vmatprep.subr.mxu0 0.0
    %610 = vmatpush1.msra.mxu0 0.0
    %611 = vmatprep.subr.mxu0 0.0
    %612 = vmatpush1.msra.mxu0 0.0
    %613 = vmatprep.subr.mxu0 0.0
    %614 = vmatpush1.msra.mxu0 0.0
    %615 = vmatprep.mubr.f32.mxu0 0.0
    %616 = vmatmul.mubr.f32.gmra.mrb[0].mxu0 %v549
    %v617 = vpop.f32.mrb[0].mxu0
    %v618 = vadd.f32 0.0, %v617
    %v619 = vpop.f32.mrb[0].mxu0
    %620 = vdwg.mxu0
    %v622 = vsel %vm328, %v44, 0
    %624 = vmatprep.subr.mxu0 0.0
    %625 = vmatpush1.msra.mxu0 %v104
    %626 = vmatprep.subr.mxu0 0.0
    %627 = vmatpush1.msra.mxu0 %v105
    %628 = vmatprep.subr.mxu0 0.0
    %629 = vmatpush1.msra.mxu0 %v106
    %630 = vmatprep.subr.mxu0 0.0
    %631 = vmatpush1.msra.mxu0 %v107
    %632 = vmatprep.subr.mxu0 0.0
    %633 = vmatpush1.msra.mxu0 %v108
    %634 = vmatprep.subr.mxu0 0.0
    %635 = vmatpush1.msra.mxu0 %v109
    %636 = vmatprep.subr.mxu0 0.0
    %637 = vmatpush1.msra.mxu0 %v110
    %638 = vmatprep.subr.mxu0 0.0
    %639 = vmatpush1.msra.mxu0 %v111
    %640 = vmatprep.subr.mxu0 0.0
    %641 = vmatpush1.msra.mxu0 0.0
    %642 = vmatprep.subr.mxu0 0.0
    %643 = vmatpush1.msra.mxu0 0.0
    %644 = vmatprep.subr.mxu0 0.0
    %645 = vmatpush1.msra.mxu0 0.0
    %646 = vmatprep.subr.mxu0 0.0
    %647 = vmatpush1.msra.mxu0 0.0
    %648 = vmatprep.subr.mxu0 0.0
    %649 = vmatpush1.msra.mxu0 0.0
    %650 = vmatprep.subr.mxu0 0.0
    %651 = vmatpush1.msra.mxu0 0.0
    %652 = vmatprep.subr.mxu0 0.0
    %653 = vmatpush1.msra.mxu0 0.0
    %654 = vmatprep.subr.mxu0 0.0
    %655 = vmatpush1.msra.mxu0 0.0
    %656 = vmatprep.subr.mxu0 0.0
    %657 = vmatpush1.msra.mxu0 0.0
    %658 = vmatprep.subr.mxu0 0.0
    %659 = vmatpush1.msra.mxu0 0.0
    %660 = vmatprep.subr.mxu0 0.0
    %661 = vmatpush1.msra.mxu0 0.0
    %662 = vmatprep.subr.mxu0 0.0
    %663 = vmatpush1.msra.mxu0 0.0
    %664 = vmatprep.subr.mxu0 0.0
    %665 = vmatpush1.msra.mxu0 0.0
    %666 = vmatprep.subr.mxu0 0.0
    %667 = vmatpush1.msra.mxu0 0.0
    %668 = vmatprep.subr.mxu0 0.0
    %669 = vmatpush1.msra.mxu0 0.0
    %670 = vmatprep.subr.mxu0 0.0
    %671 = vmatpush1.msra.mxu0 0.0
    %672 = vmatprep.subr.mxu0 0.0
    %673 = vmatpush1.msra.mxu0 0.0
    %674 = vmatprep.subr.mxu0 0.0
    %675 = vmatpush1.msra.mxu0 0.0
    %676 = vmatprep.subr.mxu0 0.0
    %677 = vmatpush1.msra.mxu0 0.0
    %678 = vmatprep.subr.mxu0 0.0
    %679 = vmatpush1.msra.mxu0 0.0
    %680 = vmatprep.subr.mxu0 0.0
    %681 = vmatpush1.msra.mxu0 0.0
    %682 = vmatprep.subr.mxu0 0.0
    %683 = vmatpush1.msra.mxu0 0.0
    %684 = vmatprep.subr.mxu0 0.0
    %685 = vmatpush1.msra.mxu0 0.0
    %686 = vmatprep.subr.mxu0 0.0
    %687 = vmatpush1.msra.mxu0 0.0
    %688 = vmatprep.mubr.f32.mxu0 0.0
    %689 = vmatmul.mubr.f32.gmra.mrb[0].mxu0 %v622
    %v690 = vpop.f32.mrb[0].mxu0
    %v691 = vadd.f32 0.0, %v690
    %v692 = vpop.f32.mrb[0].mxu0
    %693 = vdwg.mxu0
    %v695 = vsel %vm328, %v45, 0
    %697 = vmatprep.subr.mxu0 0.0
    %698 = vmatpush1.msra.mxu0 %v112
    %699 = vmatprep.subr.mxu0 0.0
    %700 = vmatpush1.msra.mxu0 %v113
    %701 = vmatprep.subr.mxu0 0.0
    %702 = vmatpush1.msra.mxu0 %v114
    %703 = vmatprep.subr.mxu0 0.0
    %704 = vmatpush1.msra.mxu0 %v115
    %705 = vmatprep.subr.mxu0 0.0
    %706 = vmatpush1.msra.mxu0 %v116
    %707 = vmatprep.subr.mxu0 0.0
    %708 = vmatpush1.msra.mxu0 %v117
    %709 = vmatprep.subr.mxu0 0.0
    %710 = vmatpush1.msra.mxu0 %v118
    %711 = vmatprep.subr.mxu0 0.0
    %712 = vmatpush1.msra.mxu0 %v119
    %713 = vmatprep.subr.mxu0 0.0
    %714 = vmatpush1.msra.mxu0 0.0
    %715 = vmatprep.subr.mxu0 0.0
    %716 = vmatpush1.msra.mxu0 0.0
    %717 = vmatprep.subr.mxu0 0.0
    %718 = vmatpush1.msra.mxu0 0.0
    %719 = vmatprep.subr.mxu0 0.0
    %720 = vmatpush1.msra.mxu0 0.0
    %721 = vmatprep.subr.mxu0 0.0
    %722 = vmatpush1.msra.mxu0 0.0
    %723 = vmatprep.subr.mxu0 0.0
    %724 = vmatpush1.msra.mxu0 0.0
    %725 = vmatprep.subr.mxu0 0.0
    %726 = vmatpush1.msra.mxu0 0.0
    %727 = vmatprep.subr.mxu0 0.0
    %728 = vmatpush1.msra.mxu0 0.0
    %729 = vmatprep.subr.mxu0 0.0
    %730 = vmatpush1.msra.mxu0 0.0
    %731 = vmatprep.subr.mxu0 0.0
    %732 = vmatpush1.msra.mxu0 0.0
    %733 = vmatprep.subr.mxu0 0.0
    %734 = vmatpush1.msra.mxu0 0.0
    %735 = vmatprep.subr.mxu0 0.0
    %736 = vmatpush1.msra.mxu0 0.0
    %737 = vmatprep.subr.mxu0 0.0
    %738 = vmatpush1.msra.mxu0 0.0
    %739 = vmatprep.subr.mxu0 0.0
    %740 = vmatpush1.msra.mxu0 0.0
    %741 = vmatprep.subr.mxu0 0.0
    %742 = vmatpush1.msra.mxu0 0.0
    %743 = vmatprep.subr.mxu0 0.0
    %744 = vmatpush1.msra.mxu0 0.0
    %745 = vmatprep.subr.mxu0 0.0
    %746 = vmatpush1.msra.mxu0 0.0
    %747 = vmatprep.subr.mxu0 0.0
    %748 = vmatpush1.msra.mxu0 0.0
    %749 = vmatprep.subr.mxu0 0.0
    %750 = vmatpush1.msra.mxu0 0.0
    %751 = vmatprep.subr.mxu0 0.0
    %752 = vmatpush1.msra.mxu0 0.0
    %753 = vmatprep.subr.mxu0 0.0
    %754 = vmatpush1.msra.mxu0 0.0
    %755 = vmatprep.subr.mxu0 0.0
    %756 = vmatpush1.msra.mxu0 0.0
    %757 = vmatprep.subr.mxu0 0.0
    %758 = vmatpush1.msra.mxu0 0.0
    %759 = vmatprep.subr.mxu0 0.0
    %760 = vmatpush1.msra.mxu0 0.0
    %761 = vmatprep.mubr.f32.mxu0 0.0
    %762 = vmatmul.mubr.f32.gmra.mrb[0].mxu0 %v695
    %v763 = vpop.f32.mrb[0].mxu0
    %v764 = vadd.f32 0.0, %v763
    %v765 = vpop.f32.mrb[0].mxu0
    %766 = vdwg.mxu0
    %v768 = vsel %vm328, %v46, 0
    %770 = vmatprep.subr.mxu0 0.0
    %771 = vmatpush1.msra.mxu0 %v120
    %772 = vmatprep.subr.mxu0 0.0
    %773 = vmatpush1.msra.mxu0 %v121
    %774 = vmatprep.subr.mxu0 0.0
    %775 = vmatpush1.msra.mxu0 %v122
    %776 = vmatprep.subr.mxu0 0.0
    %777 = vmatpush1.msra.mxu0 %v123
    %778 = vmatprep.subr.mxu0 0.0
    %779 = vmatpush1.msra.mxu0 %v124
    %780 = vmatprep.subr.mxu0 0.0
    %781 = vmatpush1.msra.mxu0 %v125
    %782 = vmatprep.subr.mxu0 0.0
    %783 = vmatpush1.msra.mxu0 %v126
    %784 = vmatprep.subr.mxu0 0.0
    %785 = vmatpush1.msra.mxu0 %v127
    %786 = vmatprep.subr.mxu0 0.0
    %787 = vmatpush1.msra.mxu0 0.0
    %788 = vmatprep.subr.mxu0 0.0
    %789 = vmatpush1.msra.mxu0 0.0
    %790 = vmatprep.subr.mxu0 0.0
    %791 = vmatpush1.msra.mxu0 0.0
    %792 = vmatprep.subr.mxu0 0.0
    %793 = vmatpush1.msra.mxu0 0.0
    %794 = vmatprep.subr.mxu0 0.0
    %795 = vmatpush1.msra.mxu0 0.0
    %796 = vmatprep.subr.mxu0 0.0
    %797 = vmatpush1.msra.mxu0 0.0
    %798 = vmatprep.subr.mxu0 0.0
    %799 = vmatpush1.msra.mxu0 0.0
    %800 = vmatprep.subr.mxu0 0.0
    %801 = vmatpush1.msra.mxu0 0.0
    %802 = vmatprep.subr.mxu0 0.0
    %803 = vmatpush1.msra.mxu0 0.0
    %804 = vmatprep.subr.mxu0 0.0
    %805 = vmatpush1.msra.mxu0 0.0
    %806 = vmatprep.subr.mxu0 0.0
    %807 = vmatpush1.msra.mxu0 0.0
    %808 = vmatprep.subr.mxu0 0.0
    %809 = vmatpush1.msra.mxu0 0.0
    %810 = vmatprep.subr.mxu0 0.0
    %811 = vmatpush1.msra.mxu0 0.0
    %812 = vmatprep.subr.mxu0 0.0
    %813 = vmatpush1.msra.mxu0 0.0
    %814 = vmatprep.subr.mxu0 0.0
    %815 = vmatpush1.msra.mxu0 0.0
    %816 = vmatprep.subr.mxu0 0.0
    %817 = vmatpush1.msra.mxu0 0.0
    %818 = vmatprep.subr.mxu0 0.0
    %819 = vmatpush1.msra.mxu0 0.0
    %820 = vmatprep.subr.mxu0 0.0
    %821 = vmatpush1.msra.mxu0 0.0
    %822 = vmatprep.subr.mxu0 0.0
    %823 = vmatpush1.msra.mxu0 0.0
    %824 = vmatprep.subr.mxu0 0.0
    %825 = vmatpush1.msra.mxu0 0.0
    %826 = vmatprep.subr.mxu0 0.0
    %827 = vmatpush1.msra.mxu0 0.0
    %828 = vmatprep.subr.mxu0 0.0
    %829 = vmatpush1.msra.mxu0 0.0
    %830 = vmatprep.subr.mxu0 0.0
    %831 = vmatpush1.msra.mxu0 0.0
    %832 = vmatprep.subr.mxu0 0.0
    %833 = vmatpush1.msra.mxu0 0.0
    %834 = vmatprep.mubr.f32.mxu0 0.0
    %835 = vmatmul.mubr.f32.gmra.mrb[0].mxu0 %v768
    %v836 = vpop.f32.mrb[0].mxu0
    %v837 = vadd.f32 0.0, %v836
    %v838 = vpop.f32.mrb[0].mxu0
    %839 = vdwg.mxu0
    %v841 = vsel %vm328, %v47, 0
    %843 = vmatprep.subr.mxu0 0.0
    %844 = vmatpush1.msra.mxu0 %v128
    %845 = vmatprep.subr.mxu0 0.0
    %846 = vmatpush1.msra.mxu0 %v129
    %847 = vmatprep.subr.mxu0 0.0
    %848 = vmatpush1.msra.mxu0 %v130
    %849 = vmatprep.subr.mxu0 0.0
    %850 = vmatpush1.msra.mxu0 %v131
    %851 = vmatprep.subr.mxu0 0.0
    %852 = vmatpush1.msra.mxu0 %v132
    %853 = vmatprep.subr.mxu0 0.0
    %854 = vmatpush1.msra.mxu0 %v133
    %855 = vmatprep.subr.mxu0 0.0
    %856 = vmatpush1.msra.mxu0 %v134
    %857 = vmatprep.subr.mxu0 0.0
    %858 = vmatpush1.msra.mxu0 %v135
    %859 = vmatprep.subr.mxu0 0.0
    %860 = vmatpush1.msra.mxu0 0.0
    %861 = vmatprep.subr.mxu0 0.0
    %862 = vmatpush1.msra.mxu0 0.0
    %863 = vmatprep.subr.mxu0 0.0
    %864 = vmatpush1.msra.mxu0 0.0
    %865 = vmatprep.subr.mxu0 0.0
    %866 = vmatpush1.msra.mxu0 0.0
    %867 = vmatprep.subr.mxu0 0.0
    %868 = vmatpush1.msra.mxu0 0.0
    %869 = vmatprep.subr.mxu0 0.0
    %870 = vmatpush1.msra.mxu0 0.0
    %871 = vmatprep.subr.mxu0 0.0
    %872 = vmatpush1.msra.mxu0 0.0
    %873 = vmatprep.subr.mxu0 0.0
    %874 = vmatpush1.msra.mxu0 0.0
    %875 = vmatprep.subr.mxu0 0.0
    %876 = vmatpush1.msra.mxu0 0.0
    %877 = vmatprep.subr.mxu0 0.0
    %878 = vmatpush1.msra.mxu0 0.0
    %879 = vmatprep.subr.mxu0 0.0
    %880 = vmatpush1.msra.mxu0 0.0
    %881 = vmatprep.subr.mxu0 0.0
    %882 = vmatpush1.msra.mxu0 0.0
    %883 = vmatprep.subr.mxu0 0.0
    %884 = vmatpush1.msra.mxu0 0.0
    %885 = vmatprep.subr.mxu0 0.0
    %886 = vmatpush1.msra.mxu0 0.0
    %887 = vmatprep.subr.mxu0 0.0
    %888 = vmatpush1.msra.mxu0 0.0
    %889 = vmatprep.subr.mxu0 0.0
    %890 = vmatpush1.msra.mxu0 0.0
    %891 = vmatprep.subr.mxu0 0.0
    %892 = vmatpush1.msra.mxu0 0.0
    %893 = vmatprep.subr.mxu0 0.0
    %894 = vmatpush1.msra.mxu0 0.0
    %895 = vmatprep.subr.mxu0 0.0
    %896 = vmatpush1.msra.mxu0 0.0
    %897 = vmatprep.subr.mxu0 0.0
    %898 = vmatpush1.msra.mxu0 0.0
    %899 = vmatprep.subr.mxu0 0.0
    %900 = vmatpush1.msra.mxu0 0.0
    %901 = vmatprep.subr.mxu0 0.0
    %902 = vmatpush1.msra.mxu0 0.0
    %903 = vmatprep.subr.mxu0 0.0
    %904 = vmatpush1.msra.mxu0 0.0
    %905 = vmatprep.subr.mxu0 0.0
    %906 = vmatpush1.msra.mxu0 0.0
    %907 = vmatprep.mubr.f32.mxu0 0.0
    %908 = vmatmul.mubr.f32.gmra.mrb[0].mxu0 %v841
    %v909 = vpop.f32.mrb[0].mxu0
    %v910 = vadd.f32 0.0, %v909
    %v911 = vpop.f32.mrb[0].mxu0
    %912 = vdwg.mxu0
    %v914 = vsel %vm328, %v48, 0
    %916 = vmatprep.subr.mxu0 0.0
    %917 = vmatpush1.msra.mxu0 %v136
    %918 = vmatprep.subr.mxu0 0.0
    %919 = vmatpush1.msra.mxu0 %v137
    %920 = vmatprep.subr.mxu0 0.0
    %921 = vmatpush1.msra.mxu0 %v138
    %922 = vmatprep.subr.mxu0 0.0
    %923 = vmatpush1.msra.mxu0 %v139
    %924 = vmatprep.subr.mxu0 0.0
    %925 = vmatpush1.msra.mxu0 %v140
    %926 = vmatprep.subr.mxu0 0.0
    %927 = vmatpush1.msra.mxu0 %v141
    %928 = vmatprep.subr.mxu0 0.0
    %929 = vmatpush1.msra.mxu0 %v142
    %930 = vmatprep.subr.mxu0 0.0
    %931 = vmatpush1.msra.mxu0 %v143
    %932 = vmatprep.subr.mxu0 0.0
    %933 = vmatpush1.msra.mxu0 0.0
    %934 = vmatprep.subr.mxu0 0.0
    %935 = vmatpush1.msra.mxu0 0.0
    %936 = vmatprep.subr.mxu0 0.0
    %937 = vmatpush1.msra.mxu0 0.0
    %938 = vmatprep.subr.mxu0 0.0
    %939 = vmatpush1.msra.mxu0 0.0
    %940 = vmatprep.subr.mxu0 0.0
    %941 = vmatpush1.msra.mxu0 0.0
    %942 = vmatprep.subr.mxu0 0.0
    %943 = vmatpush1.msra.mxu0 0.0
    %944 = vmatprep.subr.mxu0 0.0
    %945 = vmatpush1.msra.mxu0 0.0
    %946 = vmatprep.subr.mxu0 0.0
    %947 = vmatpush1.msra.mxu0 0.0
    %948 = vmatprep.subr.mxu0 0.0
    %949 = vmatpush1.msra.mxu0 0.0
    %950 = vmatprep.subr.mxu0 0.0
    %951 = vmatpush1.msra.mxu0 0.0
    %952 = vmatprep.subr.mxu0 0.0
    %953 = vmatpush1.msra.mxu0 0.0
    %954 = vmatprep.subr.mxu0 0.0
    %955 = vmatpush1.msra.mxu0 0.0
    %956 = vmatprep.subr.mxu0 0.0
    %957 = vmatpush1.msra.mxu0 0.0
    %958 = vmatprep.subr.mxu0 0.0
    %959 = vmatpush1.msra.mxu0 0.0
    %960 = vmatprep.subr.mxu0 0.0
    %961 = vmatpush1.msra.mxu0 0.0
    %962 = vmatprep.subr.mxu0 0.0
    %963 = vmatpush1.msra.mxu0 0.0
    %964 = vmatprep.subr.mxu0 0.0
    %965 = vmatpush1.msra.mxu0 0.0
    %966 = vmatprep.subr.mxu0 0.0
    %967 = vmatpush1.msra.mxu0 0.0
    %968 = vmatprep.subr.mxu0 0.0
    %969 = vmatpush1.msra.mxu0 0.0
    %970 = vmatprep.subr.mxu0 0.0
    %971 = vmatpush1.msra.mxu0 0.0
    %972 = vmatprep.subr.mxu0 0.0
    %973 = vmatpush1.msra.mxu0 0.0
    %974 = vmatprep.subr.mxu0 0.0
    %975 = vmatpush1.msra.mxu0 0.0
    %976 = vmatprep.subr.mxu0 0.0
    %977 = vmatpush1.msra.mxu0 0.0
    %978 = vmatprep.subr.mxu0 0.0
    %979 = vmatpush1.msra.mxu0 0.0
    %980 = vmatprep.mubr.f32.mxu0 0.0
    %981 = vmatmul.mubr.f32.gmra.mrb[0].mxu0 %v914
    %v982 = vpop.f32.mrb[0].mxu0
    %v983 = vadd.f32 0.0, %v982
    %v984 = vpop.f32.mrb[0].mxu0
    %985 = vdwg.mxu0
    %v987 = vsel %vm328, %v49, 0
    %989 = vmatprep.subr.mxu0 0.0
    %990 = vmatpush1.msra.mxu0 %v144
    %991 = vmatprep.subr.mxu0 0.0
    %992 = vmatpush1.msra.mxu0 %v145
    %993 = vmatprep.subr.mxu0 0.0
    %994 = vmatpush1.msra.mxu0 %v146
    %995 = vmatprep.subr.mxu0 0.0
    %996 = vmatpush1.msra.mxu0 %v147
    %997 = vmatprep.subr.mxu0 0.0
    %998 = vmatpush1.msra.mxu0 %v148
    %999 = vmatprep.subr.mxu0 0.0
    %1000 = vmatpush1.msra.mxu0 %v149
    %1001 = vmatprep.subr.mxu0 0.0
    %1002 = vmatpush1.msra.mxu0 %v150
    %1003 = vmatprep.subr.mxu0 0.0
    %1004 = vmatpush1.msra.mxu0 %v151
    %1005 = vmatprep.subr.mxu0 0.0
    %1006 = vmatpush1.msra.mxu0 0.0
    %1007 = vmatprep.subr.mxu0 0.0
    %1008 = vmatpush1.msra.mxu0 0.0
    %1009 = vmatprep.subr.mxu0 0.0
    %1010 = vmatpush1.msra.mxu0 0.0
    %1011 = vmatprep.subr.mxu0 0.0
    %1012 = vmatpush1.msra.mxu0 0.0
    %1013 = vmatprep.subr.mxu0 0.0
    %1014 = vmatpush1.msra.mxu0 0.0
    %1015 = vmatprep.subr.mxu0 0.0
    %1016 = vmatpush1.msra.mxu0 0.0
    %1017 = vmatprep.subr.mxu0 0.0
    %1018 = vmatpush1.msra.mxu0 0.0
    %1019 = vmatprep.subr.mxu0 0.0
    %1020 = vmatpush1.msra.mxu0 0.0
    %1021 = vmatprep.subr.mxu0 0.0
    %1022 = vmatpush1.msra.mxu0 0.0
    %1023 = vmatprep.subr.mxu0 0.0
    %1024 = vmatpush1.msra.mxu0 0.0
    %1025 = vmatprep.subr.mxu0 0.0
    %1026 = vmatpush1.msra.mxu0 0.0
    %1027 = vmatprep.subr.mxu0 0.0
    %1028 = vmatpush1.msra.mxu0 0.0
    %1029 = vmatprep.subr.mxu0 0.0
    %1030 = vmatpush1.msra.mxu0 0.0
    %1031 = vmatprep.subr.mxu0 0.0
    %1032 = vmatpush1.msra.mxu0 0.0
    %1033 = vmatprep.subr.mxu0 0.0
    %1034 = vmatpush1.msra.mxu0 0.0
    %1035 = vmatprep.subr.mxu0 0.0
    %1036 = vmatpush1.msra.mxu0 0.0
    %1037 = vmatprep.subr.mxu0 0.0
    %1038 = vmatpush1.msra.mxu0 0.0
    %1039 = vmatprep.subr.mxu0 0.0
    %1040 = vmatpush1.msra.mxu0 0.0
    %1041 = vmatprep.subr.mxu0 0.0
    %1042 = vmatpush1.msra.mxu0 0.0
    %1043 = vmatprep.subr.mxu0 0.0
    %1044 = vmatpush1.msra.mxu0 0.0
    %1045 = vmatprep.subr.mxu0 0.0
    %1046 = vmatpush1.msra.mxu0 0.0
    %1047 = vmatprep.subr.mxu0 0.0
    %1048 = vmatpush1.msra.mxu0 0.0
    %1049 = vmatprep.subr.mxu0 0.0
    %1050 = vmatpush1.msra.mxu0 0.0
    %1051 = vmatprep.subr.mxu0 0.0
    %1052 = vmatpush1.msra.mxu0 0.0
    %1053 = vmatprep.mubr.f32.mxu0 0.0
    %1054 = vmatmul.mubr.f32.gmra.mrb[0].mxu0 %v987
    %v1055 = vpop.f32.mrb[0].mxu0
    %v1056 = vadd.f32 0.0, %v1055
    %v1057 = vpop.f32.mrb[0].mxu0
    %1058 = vdwg.mxu0
    %v1060 = vsel %vm328, %v50, 0
    %1062 = vmatprep.subr.mxu0 0.0
    %1063 = vmatpush1.msra.mxu0 %v152
    %1064 = vmatprep.subr.mxu0 0.0
    %1065 = vmatpush1.msra.mxu0 %v153
    %1066 = vmatprep.subr.mxu0 0.0
    %1067 = vmatpush1.msra.mxu0 %v154
    %1068 = vmatprep.subr.mxu0 0.0
    %1069 = vmatpush1.msra.mxu0 %v155
    %1070 = vmatprep.subr.mxu0 0.0
    %1071 = vmatpush1.msra.mxu0 %v156
    %1072 = vmatprep.subr.mxu0 0.0
    %1073 = vmatpush1.msra.mxu0 %v157
    %1074 = vmatprep.subr.mxu0 0.0
    %1075 = vmatpush1.msra.mxu0 %v158
    %1076 = vmatprep.subr.mxu0 0.0
    %1077 = vmatpush1.msra.mxu0 %v159
    %1078 = vmatprep.subr.mxu0 0.0
    %1079 = vmatpush1.msra.mxu0 0.0
    %1080 = vmatprep.subr.mxu0 0.0
    %1081 = vmatpush1.msra.mxu0 0.0
    %1082 = vmatprep.subr.mxu0 0.0
    %1083 = vmatpush1.msra.mxu0 0.0
    %1084 = vmatprep.subr.mxu0 0.0
    %1085 = vmatpush1.msra.mxu0 0.0
    %1086 = vmatprep.subr.mxu0 0.0
    %1087 = vmatpush1.msra.mxu0 0.0
    %1088 = vmatprep.subr.mxu0 0.0
    %1089 = vmatpush1.msra.mxu0 0.0
    %1090 = vmatprep.subr.mxu0 0.0
    %1091 = vmatpush1.msra.mxu0 0.0
    %1092 = vmatprep.subr.mxu0 0.0
    %1093 = vmatpush1.msra.mxu0 0.0
    %1094 = vmatprep.subr.mxu0 0.0
    %1095 = vmatpush1.msra.mxu0 0.0
    %1096 = vmatprep.subr.mxu0 0.0
    %1097 = vmatpush1.msra.mxu0 0.0
    %1098 = vmatprep.subr.mxu0 0.0
    %1099 = vmatpush1.msra.mxu0 0.0
    %1100 = vmatprep.subr.mxu0 0.0
    %1101 = vmatpush1.msra.mxu0 0.0
    %1102 = vmatprep.subr.mxu0 0.0
    %1103 = vmatpush1.msra.mxu0 0.0
    %1104 = vmatprep.subr.mxu0 0.0
    %1105 = vmatpush1.msra.mxu0 0.0
    %1106 = vmatprep.subr.mxu0 0.0
    %1107 = vmatpush1.msra.mxu0 0.0
    %1108 = vmatprep.subr.mxu0 0.0
    %1109 = vmatpush1.msra.mxu0 0.0
    %1110 = vmatprep.subr.mxu0 0.0
    %1111 = vmatpush1.msra.mxu0 0.0
    %1112 = vmatprep.subr.mxu0 0.0
    %1113 = vmatpush1.msra.mxu0 0.0
    %1114 = vmatprep.subr.mxu0 0.0
    %1115 = vmatpush1.msra.mxu0 0.0
    %1116 = vmatprep.subr.mxu0 0.0
    %1117 = vmatpush1.msra.mxu0 0.0
    %1118 = vmatprep.subr.mxu0 0.0
    %1119 = vmatpush1.msra.mxu0 0.0
    %1120 = vmatprep.subr.mxu0 0.0
    %1121 = vmatpush1.msra.mxu0 0.0
    %1122 = vmatprep.subr.mxu0 0.0
    %1123 = vmatpush1.msra.mxu0 0.0
    %1124 = vmatprep.subr.mxu0 0.0
    %1125 = vmatpush1.msra.mxu0 0.0
    %1126 = vmatprep.mubr.f32.mxu0 0.0
    %1127 = vmatmul.mubr.f32.gmra.mrb[0].mxu0 %v1060
    %v1128 = vpop.f32.mrb[0].mxu0
    %v1129 = vadd.f32 0.0, %v1128
    %v1130 = vpop.f32.mrb[0].mxu0
    %1131 = vdwg.mxu0
    %v1133 = vsel %vm328, %v51, 0
    %1135 = vmatprep.subr.mxu0 0.0
    %1136 = vmatpush1.msra.mxu0 %v160
    %1137 = vmatprep.subr.mxu0 0.0
    %1138 = vmatpush1.msra.mxu0 %v161
    %1139 = vmatprep.subr.mxu0 0.0
    %1140 = vmatpush1.msra.mxu0 %v162
    %1141 = vmatprep.subr.mxu0 0.0
    %1142 = vmatpush1.msra.mxu0 %v163
    %1143 = vmatprep.subr.mxu0 0.0
    %1144 = vmatpush1.msra.mxu0 %v164
    %1145 = vmatprep.subr.mxu0 0.0
    %1146 = vmatpush1.msra.mxu0 %v165
    %1147 = vmatprep.subr.mxu0 0.0
    %1148 = vmatpush1.msra.mxu0 %v166
    %1149 = vmatprep.subr.mxu0 0.0
    %1150 = vmatpush1.msra.mxu0 %v167
    %1151 = vmatprep.subr.mxu0 0.0
    %1152 = vmatpush1.msra.mxu0 0.0
    %1153 = vmatprep.subr.mxu0 0.0
    %1154 = vmatpush1.msra.mxu0 0.0
    %1155 = vmatprep.subr.mxu0 0.0
    %1156 = vmatpush1.msra.mxu0 0.0
    %1157 = vmatprep.subr.mxu0 0.0
    %1158 = vmatpush1.msra.mxu0 0.0
    %1159 = vmatprep.subr.mxu0 0.0
    %1160 = vmatpush1.msra.mxu0 0.0
    %1161 = vmatprep.subr.mxu0 0.0
    %1162 = vmatpush1.msra.mxu0 0.0
    %1163 = vmatprep.subr.mxu0 0.0
    %1164 = vmatpush1.msra.mxu0 0.0
    %1165 = vmatprep.subr.mxu0 0.0
    %1166 = vmatpush1.msra.mxu0 0.0
    %1167 = vmatprep.subr.mxu0 0.0
    %1168 = vmatpush1.msra.mxu0 0.0
    %1169 = vmatprep.subr.mxu0 0.0
    %1170 = vmatpush1.msra.mxu0 0.0
    %1171 = vmatprep.subr.mxu0 0.0
    %1172 = vmatpush1.msra.mxu0 0.0
    %1173 = vmatprep.subr.mxu0 0.0
    %1174 = vmatpush1.msra.mxu0 0.0
    %1175 = vmatprep.subr.mxu0 0.0
    %1176 = vmatpush1.msra.mxu0 0.0
    %1177 = vmatprep.subr.mxu0 0.0
    %1178 = vmatpush1.msra.mxu0 0.0
    %1179 = vmatprep.subr.mxu0 0.0
    %1180 = vmatpush1.msra.mxu0 0.0
    %1181 = vmatprep.subr.mxu0 0.0
    %1182 = vmatpush1.msra.mxu0 0.0
    %1183 = vmatprep.subr.mxu0 0.0
    %1184 = vmatpush1.msra.mxu0 0.0
    %1185 = vmatprep.subr.mxu0 0.0
    %1186 = vmatpush1.msra.mxu0 0.0
    %1187 = vmatprep.subr.mxu0 0.0
    %1188 = vmatpush1.msra.mxu0 0.0
    %1189 = vmatprep.subr.mxu0 0.0
    %1190 = vmatpush1.msra.mxu0 0.0
    %1191 = vmatprep.subr.mxu0 0.0
    %1192 = vmatpush1.msra.mxu0 0.0
    %1193 = vmatprep.subr.mxu0 0.0
    %1194 = vmatpush1.msra.mxu0 0.0
    %1195 = vmatprep.subr.mxu0 0.0
    %1196 = vmatpush1.msra.mxu0 0.0
    %1197 = vmatprep.subr.mxu0 0.0
    %1198 = vmatpush1.msra.mxu0 0.0
    %1199 = vmatprep.mubr.f32.mxu0 0.0
    %1200 = vmatmul.mubr.f32.gmra.mrb[0].mxu0 %v1133
    %v1201 = vpop.f32.mrb[0].mxu0
    %v1202 = vadd.f32 0.0, %v1201
    %v1203 = vpop.f32.mrb[0].mxu0
    %1204 = vdwg.mxu0
    %v1206 = vsel %vm328, %v52, 0
    %1208 = vmatprep.subr.mxu0 0.0
    %1209 = vmatpush1.msra.mxu0 %v168
    %1210 = vmatprep.subr.mxu0 0.0
    %1211 = vmatpush1.msra.mxu0 %v169
    %1212 = vmatprep.subr.mxu0 0.0
    %1213 = vmatpush1.msra.mxu0 %v170
    %1214 = vmatprep.subr.mxu0 0.0
    %1215 = vmatpush1.msra.mxu0 %v171
    %1216 = vmatprep.subr.mxu0 0.0
    %1217 = vmatpush1.msra.mxu0 %v172
    %1218 = vmatprep.subr.mxu0 0.0
    %1219 = vmatpush1.msra.mxu0 %v173
    %1220 = vmatprep.subr.mxu0 0.0
    %1221 = vmatpush1.msra.mxu0 %v174
    %1222 = vmatprep.subr.mxu0 0.0
    %1223 = vmatpush1.msra.mxu0 %v175
    %1224 = vmatprep.subr.mxu0 0.0
    %1225 = vmatpush1.msra.mxu0 0.0
    %1226 = vmatprep.subr.mxu0 0.0
    %1227 = vmatpush1.msra.mxu0 0.0
    %1228 = vmatprep.subr.mxu0 0.0
    %1229 = vmatpush1.msra.mxu0 0.0
    %1230 = vmatprep.subr.mxu0 0.0
    %1231 = vmatpush1.msra.mxu0 0.0
    %1232 = vmatprep.subr.mxu0 0.0
    %1233 = vmatpush1.msra.mxu0 0.0
    %1234 = vmatprep.subr.mxu0 0.0
    %1235 = vmatpush1.msra.mxu0 0.0
    %1236 = vmatprep.subr.mxu0 0.0
    %1237 = vmatpush1.msra.mxu0 0.0
    %1238 = vmatprep.subr.mxu0 0.0
    %1239 = vmatpush1.msra.mxu0 0.0
    %1240 = vmatprep.subr.mxu0 0.0
    %1241 = vmatpush1.msra.mxu0 0.0
    %1242 = vmatprep.subr.mxu0 0.0
    %1243 = vmatpush1.msra.mxu0 0.0
    %1244 = vmatprep.subr.mxu0 0.0
    %1245 = vmatpush1.msra.mxu0 0.0
    %1246 = vmatprep.subr.mxu0 0.0
    %1247 = vmatpush1.msra.mxu0 0.0
    %1248 = vmatprep.subr.mxu0 0.0
    %1249 = vmatpush1.msra.mxu0 0.0
    %1250 = vmatprep.subr.mxu0 0.0
    %1251 = vmatpush1.msra.mxu0 0.0
    %1252 = vmatprep.subr.mxu0 0.0
    %1253 = vmatpush1.msra.mxu0 0.0
    %1254 = vmatprep.subr.mxu0 0.0
    %1255 = vmatpush1.msra.mxu0 0.0
    %1256 = vmatprep.subr.mxu0 0.0
    %1257 = vmatpush1.msra.mxu0 0.0
    %1258 = vmatprep.subr.mxu0 0.0
    %1259 = vmatpush1.msra.mxu0 0.0
    %1260 = vmatprep.subr.mxu0 0.0
    %1261 = vmatpush1.msra.mxu0 0.0
    %1262 = vmatprep.subr.mxu0 0.0
    %1263 = vmatpush1.msra.mxu0 0.0
    %1264 = vmatprep.subr.mxu0 0.0
    %1265 = vmatpush1.msra.mxu0 0.0
    %1266 = vmatprep.subr.mxu0 0.0
    %1267 = vmatpush1.msra.mxu0 0.0
    %1268 = vmatprep.subr.mxu0 0.0
    %1269 = vmatpush1.msra.mxu0 0.0
    %1270 = vmatprep.subr.mxu0 0.0
    %1271 = vmatpush1.msra.mxu0 0.0
    %1272 = vmatprep.mubr.f32.mxu0 0.0
    %1273 = vmatmul.mubr.f32.gmra.mrb[0].mxu0 %v1206
    %v1274 = vpop.f32.mrb[0].mxu0
    %v1275 = vadd.f32 0.0, %v1274
    %v1276 = vpop.f32.mrb[0].mxu0
    %1277 = vdwg.mxu0
    %v1279 = vsel %vm328, %v53, 0
    %1281 = vmatprep.subr.mxu0 0.0
    %1282 = vmatpush1.msra.mxu0 %v176
    %1283 = vmatprep.subr.mxu0 0.0
    %1284 = vmatpush1.msra.mxu0 %v177
    %1285 = vmatprep.subr.mxu0 0.0
    %1286 = vmatpush1.msra.mxu0 %v178
    %1287 = vmatprep.subr.mxu0 0.0
    %1288 = vmatpush1.msra.mxu0 %v179
    %1289 = vmatprep.subr.mxu0 0.0
    %1290 = vmatpush1.msra.mxu0 %v180
    %1291 = vmatprep.subr.mxu0 0.0
    %1292 = vmatpush1.msra.mxu0 %v181
    %1293 = vmatprep.subr.mxu0 0.0
    %1294 = vmatpush1.msra.mxu0 %v182
    %1295 = vmatprep.subr.mxu0 0.0
    %1296 = vmatpush1.msra.mxu0 %v183
    %1297 = vmatprep.subr.mxu0 0.0
    %1298 = vmatpush1.msra.mxu0 0.0
    %1299 = vmatprep.subr.mxu0 0.0
    %1300 = vmatpush1.msra.mxu0 0.0
    %1301 = vmatprep.subr.mxu0 0.0
    %1302 = vmatpush1.msra.mxu0 0.0
    %1303 = vmatprep.subr.mxu0 0.0
    %1304 = vmatpush1.msra.mxu0 0.0
    %1305 = vmatprep.subr.mxu0 0.0
    %1306 = vmatpush1.msra.mxu0 0.0
    %1307 = vmatprep.subr.mxu0 0.0
    %1308 = vmatpush1.msra.mxu0 0.0
    %1309 = vmatprep.subr.mxu0 0.0
    %1310 = vmatpush1.msra.mxu0 0.0
    %1311 = vmatprep.subr.mxu0 0.0
    %1312 = vmatpush1.msra.mxu0 0.0
    %1313 = vmatprep.subr.mxu0 0.0
    %1314 = vmatpush1.msra.mxu0 0.0
    %1315 = vmatprep.subr.mxu0 0.0
    %1316 = vmatpush1.msra.mxu0 0.0
    %1317 = vmatprep.subr.mxu0 0.0
    %1318 = vmatpush1.msra.mxu0 0.0
    %1319 = vmatprep.subr.mxu0 0.0
    %1320 = vmatpush1.msra.mxu0 0.0
    %1321 = vmatprep.subr.mxu0 0.0
    %1322 = vmatpush1.msra.mxu0 0.0
    %1323 = vmatprep.subr.mxu0 0.0
    %1324 = vmatpush1.msra.mxu0 0.0
    %1325 = vmatprep.subr.mxu0 0.0
    %1326 = vmatpush1.msra.mxu0 0.0
    %1327 = vmatprep.subr.mxu0 0.0
    %1328 = vmatpush1.msra.mxu0 0.0
    %1329 = vmatprep.subr.mxu0 0.0
    %1330 = vmatpush1.msra.mxu0 0.0
    %1331 = vmatprep.subr.mxu0 0.0
    %1332 = vmatpush1.msra.mxu0 0.0
    %1333 = vmatprep.subr.mxu0 0.0
    %1334 = vmatpush1.msra.mxu0 0.0
    %1335 = vmatprep.subr.mxu0 0.0
    %1336 = vmatpush1.msra.mxu0 0.0
    %1337 = vmatprep.subr.mxu0 0.0
    %1338 = vmatpush1.msra.mxu0 0.0
    %1339 = vmatprep.subr.mxu0 0.0
    %1340 = vmatpush1.msra.mxu0 0.0
    %1341 = vmatprep.subr.mxu0 0.0
    %1342 = vmatpush1.msra.mxu0 0.0
    %1343 = vmatprep.subr.mxu0 0.0
    %1344 = vmatpush1.msra.mxu0 0.0
    %1345 = vmatprep.mubr.f32.mxu0 0.0
    %1346 = vmatmul.mubr.f32.gmra.mrb[0].mxu0 %v1279
    %v1347 = vpop.f32.mrb[0].mxu0
    %v1348 = vadd.f32 0.0, %v1347
    %v1349 = vpop.f32.mrb[0].mxu0
    %1350 = vdwg.mxu0
    %v1352 = vsel %vm328, %v54, 0
    %1354 = vmatprep.subr.mxu0 0.0
    %1355 = vmatpush1.msra.mxu0 %v184
    %1356 = vmatprep.subr.mxu0 0.0
    %1357 = vmatpush1.msra.mxu0 %v185
    %1358 = vmatprep.subr.mxu0 0.0
    %1359 = vmatpush1.msra.mxu0 %v186
    %1360 = vmatprep.subr.mxu0 0.0
    %1361 = vmatpush1.msra.mxu0 %v187
    %1362 = vmatprep.subr.mxu0 0.0
    %1363 = vmatpush1.msra.mxu0 %v188
    %1364 = vmatprep.subr.mxu0 0.0
    %1365 = vmatpush1.msra.mxu0 %v189
    %1366 = vmatprep.subr.mxu0 0.0
    %1367 = vmatpush1.msra.mxu0 %v190
    %1368 = vmatprep.subr.mxu0 0.0
    %1369 = vmatpush1.msra.mxu0 %v191
    %1370 = vmatprep.subr.mxu0 0.0
    %1371 = vmatpush1.msra.mxu0 0.0
    %1372 = vmatprep.subr.mxu0 0.0
    %1373 = vmatpush1.msra.mxu0 0.0
    %1374 = vmatprep.subr.mxu0 0.0
    %1375 = vmatpush1.msra.mxu0 0.0
    %1376 = vmatprep.subr.mxu0 0.0
    %1377 = vmatpush1.msra.mxu0 0.0
    %1378 = vmatprep.subr.mxu0 0.0
    %1379 = vmatpush1.msra.mxu0 0.0
    %1380 = vmatprep.subr.mxu0 0.0
    %1381 = vmatpush1.msra.mxu0 0.0
    %1382 = vmatprep.subr.mxu0 0.0
    %1383 = vmatpush1.msra.mxu0 0.0
    %1384 = vmatprep.subr.mxu0 0.0
    %1385 = vmatpush1.msra.mxu0 0.0
    %1386 = vmatprep.subr.mxu0 0.0
    %1387 = vmatpush1.msra.mxu0 0.0
    %1388 = vmatprep.subr.mxu0 0.0
    %1389 = vmatpush1.msra.mxu0 0.0
    %1390 = vmatprep.subr.mxu0 0.0
    %1391 = vmatpush1.msra.mxu0 0.0
    %1392 = vmatprep.subr.mxu0 0.0
    %1393 = vmatpush1.msra.mxu0 0.0
    %1394 = vmatprep.subr.mxu0 0.0
    %1395 = vmatpush1.msra.mxu0 0.0
    %1396 = vmatprep.subr.mxu0 0.0
    %1397 = vmatpush1.msra.mxu0 0.0
    %1398 = vmatprep.subr.mxu0 0.0
    %1399 = vmatpush1.msra.mxu0 0.0
    %1400 = vmatprep.subr.mxu0 0.0
    %1401 = vmatpush1.msra.mxu0 0.0
    %1402 = vmatprep.subr.mxu0 0.0
    %1403 = vmatpush1.msra.mxu0 0.0
    %1404 = vmatprep.subr.mxu0 0.0
    %1405 = vmatpush1.msra.mxu0 0.0
    %1406 = vmatprep.subr.mxu0 0.0
    %1407 = vmatpush1.msra.mxu0 0.0
    %1408 = vmatprep.subr.mxu0 0.0
    %1409 = vmatpush1.msra.mxu0 0.0
    %1410 = vmatprep.subr.mxu0 0.0
    %1411 = vmatpush1.msra.mxu0 0.0
    %1412 = vmatprep.subr.mxu0 0.0
    %1413 = vmatpush1.msra.mxu0 0.0
    %1414 = vmatprep.subr.mxu0 0.0
    %1415 = vmatpush1.msra.mxu0 0.0
    %1416 = vmatprep.subr.mxu0 0.0
    %1417 = vmatpush1.msra.mxu0 0.0
    %1418 = vmatprep.mubr.f32.mxu0 0.0
    %1419 = vmatmul.mubr.f32.gmra.mrb[0].mxu0 %v1352
    %v1420 = vpop.f32.mrb[0].mxu0
    %v1421 = vadd.f32 0.0, %v1420
    %v1422 = vpop.f32.mrb[0].mxu0
    %1423 = vdwg.mxu0
    %v1425 = vsel %vm328, %v55, 0
    %1427 = vmatprep.subr.mxu0 0.0
    %1428 = vmatpush1.msra.mxu0 %v192
    %1429 = vmatprep.subr.mxu0 0.0
    %1430 = vmatpush1.msra.mxu0 %v193
    %1431 = vmatprep.subr.mxu0 0.0
    %1432 = vmatpush1.msra.mxu0 %v194
    %1433 = vmatprep.subr.mxu0 0.0
    %1434 = vmatpush1.msra.mxu0 %v195
    %1435 = vmatprep.subr.mxu0 0.0
    %1436 = vmatpush1.msra.mxu0 %v196
    %1437 = vmatprep.subr.mxu0 0.0
    %1438 = vmatpush1.msra.mxu0 %v197
    %1439 = vmatprep.subr.mxu0 0.0
    %1440 = vmatpush1.msra.mxu0 %v198
    %1441 = vmatprep.subr.mxu0 0.0
    %1442 = vmatpush1.msra.mxu0 %v199
    %1443 = vmatprep.subr.mxu0 0.0
    %1444 = vmatpush1.msra.mxu0 0.0
    %1445 = vmatprep.subr.mxu0 0.0
    %1446 = vmatpush1.msra.mxu0 0.0
    %1447 = vmatprep.subr.mxu0 0.0
    %1448 = vmatpush1.msra.mxu0 0.0
    %1449 = vmatprep.subr.mxu0 0.0
    %1450 = vmatpush1.msra.mxu0 0.0
    %1451 = vmatprep.subr.mxu0 0.0
    %1452 = vmatpush1.msra.mxu0 0.0
    %1453 = vmatprep.subr.mxu0 0.0
    %1454 = vmatpush1.msra.mxu0 0.0
    %1455 = vmatprep.subr.mxu0 0.0
    %1456 = vmatpush1.msra.mxu0 0.0
    %1457 = vmatprep.subr.mxu0 0.0
    %1458 = vmatpush1.msra.mxu0 0.0
    %1459 = vmatprep.subr.mxu0 0.0
    %1460 = vmatpush1.msra.mxu0 0.0
    %1461 = vmatprep.subr.mxu0 0.0
    %1462 = vmatpush1.msra.mxu0 0.0
    %1463 = vmatprep.subr.mxu0 0.0
    %1464 = vmatpush1.msra.mxu0 0.0
    %1465 = vmatprep.subr.mxu0 0.0
    %1466 = vmatpush1.msra.mxu0 0.0
    %1467 = vmatprep.subr.mxu0 0.0
    %1468 = vmatpush1.msra.mxu0 0.0
    %1469 = vmatprep.subr.mxu0 0.0
    %1470 = vmatpush1.msra.mxu0 0.0
    %1471 = vmatprep.subr.mxu0 0.0
    %1472 = vmatpush1.msra.mxu0 0.0
    %1473 = vmatprep.subr.mxu0 0.0
    %1474 = vmatpush1.msra.mxu0 0.0
    %1475 = vmatprep.subr.mxu0 0.0
    %1476 = vmatpush1.msra.mxu0 0.0
    %1477 = vmatprep.subr.mxu0 0.0
    %1478 = vmatpush1.msra.mxu0 0.0
    %1479 = vmatprep.subr.mxu0 0.0
    %1480 = vmatpush1.msra.mxu0 0.0
    %1481 = vmatprep.subr.mxu0 0.0
    %1482 = vmatpush1.msra.mxu0 0.0
    %1483 = vmatprep.subr.mxu0 0.0
    %1484 = vmatpush1.msra.mxu0 0.0
    %1485 = vmatprep.subr.mxu0 0.0
    %1486 = vmatpush1.msra.mxu0 0.0
    %1487 = vmatprep.subr.mxu0 0.0
    %1488 = vmatpush1.msra.mxu0 0.0
    %1489 = vmatprep.subr.mxu0 0.0
    %1490 = vmatpush1.msra.mxu0 0.0
    %1491 = vmatprep.mubr.f32.mxu0 0.0
    %1492 = vmatmul.mubr.f32.gmra.mrb[0].mxu0 %v1425
    %v1493 = vpop.f32.mrb[0].mxu0
    %v1494 = vadd.f32 0.0, %v1493
    %v1495 = vpop.f32.mrb[0].mxu0
    %1496 = vdwg.mxu0
    %v1498 = vsel %vm328, %v56, 0
    %1500 = vmatprep.subr.mxu0 0.0
    %1501 = vmatpush1.msra.mxu0 %v200
    %1502 = vmatprep.subr.mxu0 0.0
    %1503 = vmatpush1.msra.mxu0 %v201
    %1504 = vmatprep.subr.mxu0 0.0
    %1505 = vmatpush1.msra.mxu0 %v202
    %1506 = vmatprep.subr.mxu0 0.0
    %1507 = vmatpush1.msra.mxu0 %v203
    %1508 = vmatprep.subr.mxu0 0.0
    %1509 = vmatpush1.msra.mxu0 %v204
    %1510 = vmatprep.subr.mxu0 0.0
    %1511 = vmatpush1.msra.mxu0 %v205
    %1512 = vmatprep.subr.mxu0 0.0
    %1513 = vmatpush1.msra.mxu0 %v206
    %1514 = vmatprep.subr.mxu0 0.0
    %1515 = vmatpush1.msra.mxu0 %v207
    %1516 = vmatprep.subr.mxu0 0.0
    %1517 = vmatpush1.msra.mxu0 0.0
    %1518 = vmatprep.subr.mxu0 0.0
    %1519 = vmatpush1.msra.mxu0 0.0
    %1520 = vmatprep.subr.mxu0 0.0
    %1521 = vmatpush1.msra.mxu0 0.0
    %1522 = vmatprep.subr.mxu0 0.0
    %1523 = vmatpush1.msra.mxu0 0.0
    %1524 = vmatprep.subr.mxu0 0.0
    %1525 = vmatpush1.msra.mxu0 0.0
    %1526 = vmatprep.subr.mxu0 0.0
    %1527 = vmatpush1.msra.mxu0 0.0
    %1528 = vmatprep.subr.mxu0 0.0
    %1529 = vmatpush1.msra.mxu0 0.0
    %1530 = vmatprep.subr.mxu0 0.0
    %1531 = vmatpush1.msra.mxu0 0.0
    %1532 = vmatprep.subr.mxu0 0.0
    %1533 = vmatpush1.msra.mxu0 0.0
    %1534 = vmatprep.subr.mxu0 0.0
    %1535 = vmatpush1.msra.mxu0 0.0
    %1536 = vmatprep.subr.mxu0 0.0
    %1537 = vmatpush1.msra.mxu0 0.0
    %1538 = vmatprep.subr.mxu0 0.0
    %1539 = vmatpush1.msra.mxu0 0.0
    %1540 = vmatprep.subr.mxu0 0.0
    %1541 = vmatpush1.msra.mxu0 0.0
    %1542 = vmatprep.subr.mxu0 0.0
    %1543 = vmatpush1.msra.mxu0 0.0
    %1544 = vmatprep.subr.mxu0 0.0
    %1545 = vmatpush1.msra.mxu0 0.0
    %1546 = vmatprep.subr.mxu0 0.0
    %1547 = vmatpush1.msra.mxu0 0.0
    %1548 = vmatprep.subr.mxu0 0.0
    %1549 = vmatpush1.msra.mxu0 0.0
    %1550 = vmatprep.subr.mxu0 0.0
    %1551 = vmatpush1.msra.mxu0 0.0
    %1552 = vmatprep.subr.mxu0 0.0
    %1553 = vmatpush1.msra.mxu0 0.0
    %1554 = vmatprep.subr.mxu0 0.0
    %1555 = vmatpush1.msra.mxu0 0.0
    %1556 = vmatprep.subr.mxu0 0.0
    %1557 = vmatpush1.msra.mxu0 0.0
    %1558 = vmatprep.subr.mxu0 0.0
    %1559 = vmatpush1.msra.mxu0 0.0
    %1560 = vmatprep.subr.mxu0 0.0
    %1561 = vmatpush1.msra.mxu0 0.0
    %1562 = vmatprep.subr.mxu0 0.0
    %1563 = vmatpush1.msra.mxu0 0.0
    %1564 = vmatprep.mubr.f32.mxu0 0.0
    %1565 = vmatmul.mubr.f32.gmra.mrb[0].mxu0 %v1498
    %v1566 = vpop.f32.mrb[0].mxu0
    %v1567 = vadd.f32 0.0, %v1566
    %v1568 = vpop.f32.mrb[0].mxu0
    %1569 = vdwg.mxu0
    %v1571 = vsel %vm328, %v57, 0
    %1573 = vmatprep.subr.mxu0 0.0
    %1574 = vmatpush1.msra.mxu0 %v208
    %1575 = vmatprep.subr.mxu0 0.0
    %1576 = vmatpush1.msra.mxu0 %v209
    %1577 = vmatprep.subr.mxu0 0.0
    %1578 = vmatpush1.msra.mxu0 %v210
    %1579 = vmatprep.subr.mxu0 0.0
    %1580 = vmatpush1.msra.mxu0 %v211
    %1581 = vmatprep.subr.mxu0 0.0
    %1582 = vmatpush1.msra.mxu0 %v212
    %1583 = vmatprep.subr.mxu0 0.0
    %1584 = vmatpush1.msra.mxu0 %v213
    %1585 = vmatprep.subr.mxu0 0.0
    %1586 = vmatpush1.msra.mxu0 %v214
    %1587 = vmatprep.subr.mxu0 0.0
    %1588 = vmatpush1.msra.mxu0 %v215
    %1589 = vmatprep.subr.mxu0 0.0
    %1590 = vmatpush1.msra.mxu0 0.0
    %1591 = vmatprep.subr.mxu0 0.0
    %1592 = vmatpush1.msra.mxu0 0.0
    %1593 = vmatprep.subr.mxu0 0.0
    %1594 = vmatpush1.msra.mxu0 0.0
    %1595 = vmatprep.subr.mxu0 0.0
    %1596 = vmatpush1.msra.mxu0 0.0
    %1597 = vmatprep.subr.mxu0 0.0
    %1598 = vmatpush1.msra.mxu0 0.0
    %1599 = vmatprep.subr.mxu0 0.0
    %1600 = vmatpush1.msra.mxu0 0.0
    %1601 = vmatprep.subr.mxu0 0.0
    %1602 = vmatpush1.msra.mxu0 0.0
    %1603 = vmatprep.subr.mxu0 0.0
    %1604 = vmatpush1.msra.mxu0 0.0
    %1605 = vmatprep.subr.mxu0 0.0
    %1606 = vmatpush1.msra.mxu0 0.0
    %1607 = vmatprep.subr.mxu0 0.0
    %1608 = vmatpush1.msra.mxu0 0.0
    %1609 = vmatprep.subr.mxu0 0.0
    %1610 = vmatpush1.msra.mxu0 0.0
    %1611 = vmatprep.subr.mxu0 0.0
    %1612 = vmatpush1.msra.mxu0 0.0
    %1613 = vmatprep.subr.mxu0 0.0
    %1614 = vmatpush1.msra.mxu0 0.0
    %1615 = vmatprep.subr.mxu0 0.0
    %1616 = vmatpush1.msra.mxu0 0.0
    %1617 = vmatprep.subr.mxu0 0.0
    %1618 = vmatpush1.msra.mxu0 0.0
    %1619 = vmatprep.subr.mxu0 0.0
    %1620 = vmatpush1.msra.mxu0 0.0
    %1621 = vmatprep.subr.mxu0 0.0
    %1622 = vmatpush1.msra.mxu0 0.0
    %1623 = vmatprep.subr.mxu0 0.0
    %1624 = vmatpush1.msra.mxu0 0.0
    %1625 = vmatprep.subr.mxu0 0.0
    %1626 = vmatpush1.msra.mxu0 0.0
    %1627 = vmatprep.subr.mxu0 0.0
    %1628 = vmatpush1.msra.mxu0 0.0
    %1629 = vmatprep.subr.mxu0 0.0
    %1630 = vmatpush1.msra.mxu0 0.0
    %1631 = vmatprep.subr.mxu0 0.0
    %1632 = vmatpush1.msra.mxu0 0.0
    %1633 = vmatprep.subr.mxu0 0.0
    %1634 = vmatpush1.msra.mxu0 0.0
    %1635 = vmatprep.subr.mxu0 0.0
    %1636 = vmatpush1.msra.mxu0 0.0
    %1637 = vmatprep.mubr.f32.mxu0 0.0
    %1638 = vmatmul.mubr.f32.gmra.mrb[0].mxu0 %v1571
    %v1639 = vpop.f32.mrb[0].mxu0
    %v1640 = vadd.f32 0.0, %v1639
    %v1641 = vpop.f32.mrb[0].mxu0
    %1642 = vdwg.mxu0
    %v1644 = vsel %vm328, %v58, 0
    %1646 = vmatprep.subr.mxu0 0.0
    %1647 = vmatpush1.msra.mxu0 %v216
    %1648 = vmatprep.subr.mxu0 0.0
    %1649 = vmatpush1.msra.mxu0 %v217
    %1650 = vmatprep.subr.mxu0 0.0
    %1651 = vmatpush1.msra.mxu0 %v218
    %1652 = vmatprep.subr.mxu0 0.0
    %1653 = vmatpush1.msra.mxu0 %v219
    %1654 = vmatprep.subr.mxu0 0.0
    %1655 = vmatpush1.msra.mxu0 %v220
    %1656 = vmatprep.subr.mxu0 0.0
    %1657 = vmatpush1.msra.mxu0 %v221
    %1658 = vmatprep.subr.mxu0 0.0
    %1659 = vmatpush1.msra.mxu0 %v222
    %1660 = vmatprep.subr.mxu0 0.0
    %1661 = vmatpush1.msra.mxu0 %v223
    %1662 = vmatprep.subr.mxu0 0.0
    %1663 = vmatpush1.msra.mxu0 0.0
    %1664 = vmatprep.subr.mxu0 0.0
    %1665 = vmatpush1.msra.mxu0 0.0
    %1666 = vmatprep.subr.mxu0 0.0
    %1667 = vmatpush1.msra.mxu0 0.0
    %1668 = vmatprep.subr.mxu0 0.0
    %1669 = vmatpush1.msra.mxu0 0.0
    %1670 = vmatprep.subr.mxu0 0.0
    %1671 = vmatpush1.msra.mxu0 0.0
    %1672 = vmatprep.subr.mxu0 0.0
    %1673 = vmatpush1.msra.mxu0 0.0
    %1674 = vmatprep.subr.mxu0 0.0
    %1675 = vmatpush1.msra.mxu0 0.0
    %1676 = vmatprep.subr.mxu0 0.0
    %1677 = vmatpush1.msra.mxu0 0.0
    %1678 = vmatprep.subr.mxu0 0.0
    %1679 = vmatpush1.msra.mxu0 0.0
    %1680 = vmatprep.subr.mxu0 0.0
    %1681 = vmatpush1.msra.mxu0 0.0
    %1682 = vmatprep.subr.mxu0 0.0
    %1683 = vmatpush1.msra.mxu0 0.0
    %1684 = vmatprep.subr.mxu0 0.0
    %1685 = vmatpush1.msra.mxu0 0.0
    %1686 = vmatprep.subr.mxu0 0.0
    %1687 = vmatpush1.msra.mxu0 0.0
    %1688 = vmatprep.subr.mxu0 0.0
    %1689 = vmatpush1.msra.mxu0 0.0
    %1690 = vmatprep.subr.mxu0 0.0
    %1691 = vmatpush1.msra.mxu0 0.0
    %1692 = vmatprep.subr.mxu0 0.0
    %1693 = vmatpush1.msra.mxu0 0.0
    %1694 = vmatprep.subr.mxu0 0.0
    %1695 = vmatpush1.msra.mxu0 0.0
    %1696 = vmatprep.subr.mxu0 0.0
    %1697 = vmatpush1.msra.mxu0 0.0
    %1698 = vmatprep.subr.mxu0 0.0
    %1699 = vmatpush1.msra.mxu0 0.0
    %1700 = vmatprep.subr.mxu0 0.0
    %1701 = vmatpush1.msra.mxu0 0.0
    %1702 = vmatprep.subr.mxu0 0.0
    %1703 = vmatpush1.msra.mxu0 0.0
    %1704 = vmatprep.subr.mxu0 0.0
    %1705 = vmatpush1.msra.mxu0 0.0
    %1706 = vmatprep.subr.mxu0 0.0
    %1707 = vmatpush1.msra.mxu0 0.0
    %1708 = vmatprep.subr.mxu0 0.0
    %1709 = vmatpush1.msra.mxu0 0.0
    %1710 = vmatprep.mubr.f32.mxu0 0.0
    %1711 = vmatmul.mubr.f32.gmra.mrb[0].mxu0 %v1644
    %v1712 = vpop.f32.mrb[0].mxu0
    %v1713 = vadd.f32 0.0, %v1712
    %v1714 = vpop.f32.mrb[0].mxu0
    %1715 = vdwg.mxu0
    %v1717 = vsel %vm328, %v59, 0
    %1719 = vmatprep.subr.mxu0 0.0
    %1720 = vmatpush1.msra.mxu0 %v224
    %1721 = vmatprep.subr.mxu0 0.0
    %1722 = vmatpush1.msra.mxu0 %v225
    %1723 = vmatprep.subr.mxu0 0.0
    %1724 = vmatpush1.msra.mxu0 %v226
    %1725 = vmatprep.subr.mxu0 0.0
    %1726 = vmatpush1.msra.mxu0 %v227
    %1727 = vmatprep.subr.mxu0 0.0
    %1728 = vmatpush1.msra.mxu0 %v228
    %1729 = vmatprep.subr.mxu0 0.0
    %1730 = vmatpush1.msra.mxu0 %v229
    %1731 = vmatprep.subr.mxu0 0.0
    %1732 = vmatpush1.msra.mxu0 %v230
    %1733 = vmatprep.subr.mxu0 0.0
    %1734 = vmatpush1.msra.mxu0 %v231
    %1735 = vmatprep.subr.mxu0 0.0
    %1736 = vmatpush1.msra.mxu0 0.0
    %1737 = vmatprep.subr.mxu0 0.0
    %1738 = vmatpush1.msra.mxu0 0.0
    %1739 = vmatprep.subr.mxu0 0.0
    %1740 = vmatpush1.msra.mxu0 0.0
    %1741 = vmatprep.subr.mxu0 0.0
    %1742 = vmatpush1.msra.mxu0 0.0
    %1743 = vmatprep.subr.mxu0 0.0
    %1744 = vmatpush1.msra.mxu0 0.0
    %1745 = vmatprep.subr.mxu0 0.0
    %1746 = vmatpush1.msra.mxu0 0.0
    %1747 = vmatprep.subr.mxu0 0.0
    %1748 = vmatpush1.msra.mxu0 0.0
    %1749 = vmatprep.subr.mxu0 0.0
    %1750 = vmatpush1.msra.mxu0 0.0
    %1751 = vmatprep.subr.mxu0 0.0
    %1752 = vmatpush1.msra.mxu0 0.0
    %1753 = vmatprep.subr.mxu0 0.0
    %1754 = vmatpush1.msra.mxu0 0.0
    %1755 = vmatprep.subr.mxu0 0.0
    %1756 = vmatpush1.msra.mxu0 0.0
    %1757 = vmatprep.subr.mxu0 0.0
    %1758 = vmatpush1.msra.mxu0 0.0
    %1759 = vmatprep.subr.mxu0 0.0
    %1760 = vmatpush1.msra.mxu0 0.0
    %1761 = vmatprep.subr.mxu0 0.0
    %1762 = vmatpush1.msra.mxu0 0.0
    %1763 = vmatprep.subr.mxu0 0.0
    %1764 = vmatpush1.msra.mxu0 0.0
    %1765 = vmatprep.subr.mxu0 0.0
    %1766 = vmatpush1.msra.mxu0 0.0
    %1767 = vmatprep.subr.mxu0 0.0
    %1768 = vmatpush1.msra.mxu0 0.0
    %1769 = vmatprep.subr.mxu0 0.0
    %1770 = vmatpush1.msra.mxu0 0.0
    %1771 = vmatprep.subr.mxu0 0.0
    %1772 = vmatpush1.msra.mxu0 0.0
    %1773 = vmatprep.subr.mxu0 0.0
    %1774 = vmatpush1.msra.mxu0 0.0
    %1775 = vmatprep.subr.mxu0 0.0
    %1776 = vmatpush1.msra.mxu0 0.0
    %1777 = vmatprep.subr.mxu0 0.0
    %1778 = vmatpush1.msra.mxu0 0.0
    %1779 = vmatprep.subr.mxu0 0.0
    %1780 = vmatpush1.msra.mxu0 0.0
    %1781 = vmatprep.subr.mxu0 0.0
    %1782 = vmatpush1.msra.mxu0 0.0
    %1783 = vmatprep.mubr.f32.mxu0 0.0
    %1784 = vmatmul.mubr.f32.gmra.mrb[0].mxu0 %v1717
    %v1785 = vpop.f32.mrb[0].mxu0
    %v1786 = vadd.f32 0.0, %v1785
    %v1787 = vpop.f32.mrb[0].mxu0
    %1788 = vdwg.mxu0
    %v1790 = vsel %vm328, %v60, 0
    %1792 = vmatprep.subr.mxu0 0.0
    %1793 = vmatpush1.msra.mxu0 %v232
    %1794 = vmatprep.subr.mxu0 0.0
    %1795 = vmatpush1.msra.mxu0 %v233
    %1796 = vmatprep.subr.mxu0 0.0
    %1797 = vmatpush1.msra.mxu0 %v234
    %1798 = vmatprep.subr.mxu0 0.0
    %1799 = vmatpush1.msra.mxu0 %v235
    %1800 = vmatprep.subr.mxu0 0.0
    %1801 = vmatpush1.msra.mxu0 %v236
    %1802 = vmatprep.subr.mxu0 0.0
    %1803 = vmatpush1.msra.mxu0 %v237
    %1804 = vmatprep.subr.mxu0 0.0
    %1805 = vmatpush1.msra.mxu0 %v238
    %1806 = vmatprep.subr.mxu0 0.0
    %1807 = vmatpush1.msra.mxu0 %v239
    %1808 = vmatprep.subr.mxu0 0.0
    %1809 = vmatpush1.msra.mxu0 0.0
    %1810 = vmatprep.subr.mxu0 0.0
    %1811 = vmatpush1.msra.mxu0 0.0
    %1812 = vmatprep.subr.mxu0 0.0
    %1813 = vmatpush1.msra.mxu0 0.0
    %1814 = vmatprep.subr.mxu0 0.0
    %1815 = vmatpush1.msra.mxu0 0.0
    %1816 = vmatprep.subr.mxu0 0.0
    %1817 = vmatpush1.msra.mxu0 0.0
    %1818 = vmatprep.subr.mxu0 0.0
    %1819 = vmatpush1.msra.mxu0 0.0
    %1820 = vmatprep.subr.mxu0 0.0
    %1821 = vmatpush1.msra.mxu0 0.0
    %1822 = vmatprep.subr.mxu0 0.0
    %1823 = vmatpush1.msra.mxu0 0.0
    %1824 = vmatprep.subr.mxu0 0.0
    %1825 = vmatpush1.msra.mxu0 0.0
    %1826 = vmatprep.subr.mxu0 0.0
    %1827 = vmatpush1.msra.mxu0 0.0
    %1828 = vmatprep.subr.mxu0 0.0
    %1829 = vmatpush1.msra.mxu0 0.0
    %1830 = vmatprep.subr.mxu0 0.0
    %1831 = vmatpush1.msra.mxu0 0.0
    %1832 = vmatprep.subr.mxu0 0.0
    %1833 = vmatpush1.msra.mxu0 0.0
    %1834 = vmatprep.subr.mxu0 0.0
    %1835 = vmatpush1.msra.mxu0 0.0
    %1836 = vmatprep.subr.mxu0 0.0
    %1837 = vmatpush1.msra.mxu0 0.0
    %1838 = vmatprep.subr.mxu0 0.0
    %1839 = vmatpush1.msra.mxu0 0.0
    %1840 = vmatprep.subr.mxu0 0.0
    %1841 = vmatpush1.msra.mxu0 0.0
    %1842 = vmatprep.subr.mxu0 0.0
    %1843 = vmatpush1.msra.mxu0 0.0
    %1844 = vmatprep.subr.mxu0 0.0
    %1845 = vmatpush1.msra.mxu0 0.0
    %1846 = vmatprep.subr.mxu0 0.0
    %1847 = vmatpush1.msra.mxu0 0.0
    %1848 = vmatprep.subr.mxu0 0.0
    %1849 = vmatpush1.msra.mxu0 0.0
    %1850 = vmatprep.subr.mxu0 0.0
    %1851 = vmatpush1.msra.mxu0 0.0
    %1852 = vmatprep.subr.mxu0 0.0
    %1853 = vmatpush1.msra.mxu0 0.0
    %1854 = vmatprep.subr.mxu0 0.0
    %1855 = vmatpush1.msra.mxu0 0.0
    %1856 = vmatprep.mubr.f32.mxu0 0.0
    %1857 = vmatmul.mubr.f32.gmra.mrb[0].mxu0 %v1790
    %v1858 = vpop.f32.mrb[0].mxu0
    %v1859 = vadd.f32 0.0, %v1858
    %v1860 = vpop.f32.mrb[0].mxu0
    %1861 = vdwg.mxu0
    %v1863 = vsel %vm328, %v61, 0
    %1865 = vmatprep.subr.mxu0 0.0
    %1866 = vmatpush1.msra.mxu0 %v240
    %1867 = vmatprep.subr.mxu0 0.0
    %1868 = vmatpush1.msra.mxu0 %v241
    %1869 = vmatprep.subr.mxu0 0.0
    %1870 = vmatpush1.msra.mxu0 %v242
    %1871 = vmatprep.subr.mxu0 0.0
    %1872 = vmatpush1.msra.mxu0 %v243
    %1873 = vmatprep.subr.mxu0 0.0
    %1874 = vmatpush1.msra.mxu0 %v244
    %1875 = vmatprep.subr.mxu0 0.0
    %1876 = vmatpush1.msra.mxu0 %v245
    %1877 = vmatprep.subr.mxu0 0.0
    %1878 = vmatpush1.msra.mxu0 %v246
    %1879 = vmatprep.subr.mxu0 0.0
    %1880 = vmatpush1.msra.mxu0 %v247
    %1881 = vmatprep.subr.mxu0 0.0
    %1882 = vmatpush1.msra.mxu0 0.0
    %1883 = vmatprep.subr.mxu0 0.0
    %1884 = vmatpush1.msra.mxu0 0.0
    %1885 = vmatprep.subr.mxu0 0.0
    %1886 = vmatpush1.msra.mxu0 0.0
    %1887 = vmatprep.subr.mxu0 0.0
    %1888 = vmatpush1.msra.mxu0 0.0
    %1889 = vmatprep.subr.mxu0 0.0
    %1890 = vmatpush1.msra.mxu0 0.0
    %1891 = vmatprep.subr.mxu0 0.0
    %1892 = vmatpush1.msra.mxu0 0.0
    %1893 = vmatprep.subr.mxu0 0.0
    %1894 = vmatpush1.msra.mxu0 0.0
    %1895 = vmatprep.subr.mxu0 0.0
    %1896 = vmatpush1.msra.mxu0 0.0
    %1897 = vmatprep.subr.mxu0 0.0
    %1898 = vmatpush1.msra.mxu0 0.0
    %1899 = vmatprep.subr.mxu0 0.0
    %1900 = vmatpush1.msra.mxu0 0.0
    %1901 = vmatprep.subr.mxu0 0.0
    %1902 = vmatpush1.msra.mxu0 0.0
    %1903 = vmatprep.subr.mxu0 0.0
    %1904 = vmatpush1.msra.mxu0 0.0
    %1905 = vmatprep.subr.mxu0 0.0
    %1906 = vmatpush1.msra.mxu0 0.0
    %1907 = vmatprep.subr.mxu0 0.0
    %1908 = vmatpush1.msra.mxu0 0.0
    %1909 = vmatprep.subr.mxu0 0.0
    %1910 = vmatpush1.msra.mxu0 0.0
    %1911 = vmatprep.subr.mxu0 0.0
    %1912 = vmatpush1.msra.mxu0 0.0
    %1913 = vmatprep.subr.mxu0 0.0
    %1914 = vmatpush1.msra.mxu0 0.0
    %1915 = vmatprep.subr.mxu0 0.0
    %1916 = vmatpush1.msra.mxu0 0.0
    %1917 = vmatprep.subr.mxu0 0.0
    %1918 = vmatpush1.msra.mxu0 0.0
    %1919 = vmatprep.subr.mxu0 0.0
    %1920 = vmatpush1.msra.mxu0 0.0
    %1921 = vmatprep.subr.mxu0 0.0
    %1922 = vmatpush1.msra.mxu0 0.0
    %1923 = vmatprep.subr.mxu0 0.0
    %1924 = vmatpush1.msra.mxu0 0.0
    %1925 = vmatprep.subr.mxu0 0.0
    %1926 = vmatpush1.msra.mxu0 0.0
    %1927 = vmatprep.subr.mxu0 0.0
    %1928 = vmatpush1.msra.mxu0 0.0
    %1929 = vmatprep.mubr.f32.mxu0 0.0
    %1930 = vmatmul.mubr.f32.gmra.mrb[0].mxu0 %v1863
    %v1931 = vpop.f32.mrb[0].mxu0
    %v1932 = vadd.f32 0.0, %v1931
    %v1933 = vpop.f32.mrb[0].mxu0
    %1934 = vdwg.mxu0
    %v1936 = vsel %vm328, %v62, 0
    %1938 = vmatprep.subr.mxu0 0.0
    %1939 = vmatpush1.msra.mxu0 %v248
    %1940 = vmatprep.subr.mxu0 0.0
    %1941 = vmatpush1.msra.mxu0 %v249
    %1942 = vmatprep.subr.mxu0 0.0
    %1943 = vmatpush1.msra.mxu0 %v250
    %1944 = vmatprep.subr.mxu0 0.0
    %1945 = vmatpush1.msra.mxu0 %v251
    %1946 = vmatprep.subr.mxu0 0.0
    %1947 = vmatpush1.msra.mxu0 %v252
    %1948 = vmatprep.subr.mxu0 0.0
    %1949 = vmatpush1.msra.mxu0 %v253
    %1950 = vmatprep.subr.mxu0 0.0
    %1951 = vmatpush1.msra.mxu0 %v254
    %1952 = vmatprep.subr.mxu0 0.0
    %1953 = vmatpush1.msra.mxu0 %v255
    %1954 = vmatprep.subr.mxu0 0.0
    %1955 = vmatpush1.msra.mxu0 0.0
    %1956 = vmatprep.subr.mxu0 0.0
    %1957 = vmatpush1.msra.mxu0 0.0
    %1958 = vmatprep.subr.mxu0 0.0
    %1959 = vmatpush1.msra.mxu0 0.0
    %1960 = vmatprep.subr.mxu0 0.0
    %1961 = vmatpush1.msra.mxu0 0.0
    %1962 = vmatprep.subr.mxu0 0.0
    %1963 = vmatpush1.msra.mxu0 0.0
    %1964 = vmatprep.subr.mxu0 0.0
    %1965 = vmatpush1.msra.mxu0 0.0
    %1966 = vmatprep.subr.mxu0 0.0
    %1967 = vmatpush1.msra.mxu0 0.0
    %1968 = vmatprep.subr.mxu0 0.0
    %1969 = vmatpush1.msra.mxu0 0.0
    %1970 = vmatprep.subr.mxu0 0.0
    %1971 = vmatpush1.msra.mxu0 0.0
    %1972 = vmatprep.subr.mxu0 0.0
    %1973 = vmatpush1.msra.mxu0 0.0
    %1974 = vmatprep.subr.mxu0 0.0
    %1975 = vmatpush1.msra.mxu0 0.0
    %1976 = vmatprep.subr.mxu0 0.0
    %1977 = vmatpush1.msra.mxu0 0.0
    %1978 = vmatprep.subr.mxu0 0.0
    %1979 = vmatpush1.msra.mxu0 0.0
    %1980 = vmatprep.subr.mxu0 0.0
    %1981 = vmatpush1.msra.mxu0 0.0
    %1982 = vmatprep.subr.mxu0 0.0
    %1983 = vmatpush1.msra.mxu0 0.0
    %1984 = vmatprep.subr.mxu0 0.0
    %1985 = vmatpush1.msra.mxu0 0.0
    %1986 = vmatprep.subr.mxu0 0.0
    %1987 = vmatpush1.msra.mxu0 0.0
    %1988 = vmatprep.subr.mxu0 0.0
    %1989 = vmatpush1.msra.mxu0 0.0
    %1990 = vmatprep.subr.mxu0 0.0
    %1991 = vmatpush1.msra.mxu0 0.0
    %1992 = vmatprep.subr.mxu0 0.0
    %1993 = vmatpush1.msra.mxu0 0.0
    %1994 = vmatprep.subr.mxu0 0.0
    %1995 = vmatpush1.msra.mxu0 0.0
    %1996 = vmatprep.subr.mxu0 0.0
    %1997 = vmatpush1.msra.mxu0 0.0
    %1998 = vmatprep.subr.mxu0 0.0
    %1999 = vmatpush1.msra.mxu0 0.0
    %2000 = vmatprep.subr.mxu0 0.0
    %2001 = vmatpush1.msra.mxu0 0.0
    %2002 = vmatprep.mubr.f32.mxu0 0.0
    %2003 = vmatmul.mubr.f32.gmra.mrb[0].mxu0 %v1936
    %v2004 = vpop.f32.mrb[0].mxu0
    %v2005 = vadd.f32 0.0, %v2004
    %v2006 = vpop.f32.mrb[0].mxu0
    %2007 = vdwg.mxu0
    %v2009 = vsel %vm328, %v63, 0
    %2011 = vmatprep.subr.mxu0 0.0
    %2012 = vmatpush1.msra.mxu0 %v256
    %2013 = vmatprep.subr.mxu0 0.0
    %2014 = vmatpush1.msra.mxu0 %v257
    %2015 = vmatprep.subr.mxu0 0.0
    %2016 = vmatpush1.msra.mxu0 %v258
    %2017 = vmatprep.subr.mxu0 0.0
    %2018 = vmatpush1.msra.mxu0 %v259
    %2019 = vmatprep.subr.mxu0 0.0
    %2020 = vmatpush1.msra.mxu0 %v260
    %2021 = vmatprep.subr.mxu0 0.0
    %2022 = vmatpush1.msra.mxu0 %v261
    %2023 = vmatprep.subr.mxu0 0.0
    %2024 = vmatpush1.msra.mxu0 %v262
    %2025 = vmatprep.subr.mxu0 0.0
    %2026 = vmatpush1.msra.mxu0 %v263
    %2027 = vmatprep.subr.mxu0 0.0
    %2028 = vmatpush1.msra.mxu0 0.0
    %2029 = vmatprep.subr.mxu0 0.0
    %2030 = vmatpush1.msra.mxu0 0.0
    %2031 = vmatprep.subr.mxu0 0.0
    %2032 = vmatpush1.msra.mxu0 0.0
    %2033 = vmatprep.subr.mxu0 0.0
    %2034 = vmatpush1.msra.mxu0 0.0
    %2035 = vmatprep.subr.mxu0 0.0
    %2036 = vmatpush1.msra.mxu0 0.0
    %2037 = vmatprep.subr.mxu0 0.0
    %2038 = vmatpush1.msra.mxu0 0.0
    %2039 = vmatprep.subr.mxu0 0.0
    %2040 = vmatpush1.msra.mxu0 0.0
    %2041 = vmatprep.subr.mxu0 0.0
    %2042 = vmatpush1.msra.mxu0 0.0
    %2043 = vmatprep.subr.mxu0 0.0
    %2044 = vmatpush1.msra.mxu0 0.0
    %2045 = vmatprep.subr.mxu0 0.0
    %2046 = vmatpush1.msra.mxu0 0.0
    %2047 = vmatprep.subr.mxu0 0.0
    %2048 = vmatpush1.msra.mxu0 0.0
    %2049 = vmatprep.subr.mxu0 0.0
    %2050 = vmatpush1.msra.mxu0 0.0
    %2051 = vmatprep.subr.mxu0 0.0
    %2052 = vmatpush1.msra.mxu0 0.0
    %2053 = vmatprep.subr.mxu0 0.0
    %2054 = vmatpush1.msra.mxu0 0.0
    %2055 = vmatprep.subr.mxu0 0.0
    %2056 = vmatpush1.msra.mxu0 0.0
    %2057 = vmatprep.subr.mxu0 0.0
    %2058 = vmatpush1.msra.mxu0 0.0
    %2059 = vmatprep.subr.mxu0 0.0
    %2060 = vmatpush1.msra.mxu0 0.0
    %2061 = vmatprep.subr.mxu0 0.0
    %2062 = vmatpush1.msra.mxu0 0.0
    %2063 = vmatprep.subr.mxu0 0.0
    %2064 = vmatpush1.msra.mxu0 0.0
    %2065 = vmatprep.subr.mxu0 0.0
    %2066 = vmatpush1.msra.mxu0 0.0
    %2067 = vmatprep.subr.mxu0 0.0
    %2068 = vmatpush1.msra.mxu0 0.0
    %2069 = vmatprep.subr.mxu0 0.0
    %2070 = vmatpush1.msra.mxu0 0.0
    %2071 = vmatprep.subr.mxu0 0.0
    %2072 = vmatpush1.msra.mxu0 0.0
    %2073 = vmatprep.subr.mxu0 0.0
    %2074 = vmatpush1.msra.mxu0 0.0
    %2075 = vmatprep.mubr.f32.mxu0 0.0
    %2076 = vmatmul.mubr.f32.gmra.mrb[0].mxu0 %v2009
    %v2077 = vpop.f32.mrb[0].mxu0
    %v2078 = vadd.f32 0.0, %v2077
    %v2079 = vpop.f32.mrb[0].mxu0
    %2080 = vdwg.mxu0
    %v2082 = vsel %vm328, %v64, 0
    %2084 = vmatprep.subr.mxu0 0.0
    %2085 = vmatpush1.msra.mxu0 %v264
    %2086 = vmatprep.subr.mxu0 0.0
    %2087 = vmatpush1.msra.mxu0 %v265
    %2088 = vmatprep.subr.mxu0 0.0
    %2089 = vmatpush1.msra.mxu0 %v266
    %2090 = vmatprep.subr.mxu0 0.0
    %2091 = vmatpush1.msra.mxu0 %v267
    %2092 = vmatprep.subr.mxu0 0.0
    %2093 = vmatpush1.msra.mxu0 %v268
    %2094 = vmatprep.subr.mxu0 0.0
    %2095 = vmatpush1.msra.mxu0 %v269
    %2096 = vmatprep.subr.mxu0 0.0
    %2097 = vmatpush1.msra.mxu0 %v270
    %2098 = vmatprep.subr.mxu0 0.0
    %2099 = vmatpush1.msra.mxu0 %v271
    %2100 = vmatprep.subr.mxu0 0.0
    %2101 = vmatpush1.msra.mxu0 0.0
    %2102 = vmatprep.subr.mxu0 0.0
    %2103 = vmatpush1.msra.mxu0 0.0
    %2104 = vmatprep.subr.mxu0 0.0
    %2105 = vmatpush1.msra.mxu0 0.0
    %2106 = vmatprep.subr.mxu0 0.0
    %2107 = vmatpush1.msra.mxu0 0.0
    %2108 = vmatprep.subr.mxu0 0.0
    %2109 = vmatpush1.msra.mxu0 0.0
    %2110 = vmatprep.subr.mxu0 0.0
    %2111 = vmatpush1.msra.mxu0 0.0
    %2112 = vmatprep.subr.mxu0 0.0
    %2113 = vmatpush1.msra.mxu0 0.0
    %2114 = vmatprep.subr.mxu0 0.0
    %2115 = vmatpush1.msra.mxu0 0.0
    %2116 = vmatprep.subr.mxu0 0.0
    %2117 = vmatpush1.msra.mxu0 0.0
    %2118 = vmatprep.subr.mxu0 0.0
    %2119 = vmatpush1.msra.mxu0 0.0
    %2120 = vmatprep.subr.mxu0 0.0
    %2121 = vmatpush1.msra.mxu0 0.0
    %2122 = vmatprep.subr.mxu0 0.0
    %2123 = vmatpush1.msra.mxu0 0.0
    %2124 = vmatprep.subr.mxu0 0.0
    %2125 = vmatpush1.msra.mxu0 0.0
    %2126 = vmatprep.subr.mxu0 0.0
    %2127 = vmatpush1.msra.mxu0 0.0
    %2128 = vmatprep.subr.mxu0 0.0
    %2129 = vmatpush1.msra.mxu0 0.0
    %2130 = vmatprep.subr.mxu0 0.0
    %2131 = vmatpush1.msra.mxu0 0.0
    %2132 = vmatprep.subr.mxu0 0.0
    %2133 = vmatpush1.msra.mxu0 0.0
    %2134 = vmatprep.subr.mxu0 0.0
    %2135 = vmatpush1.msra.mxu0 0.0
    %2136 = vmatprep.subr.mxu0 0.0
    %2137 = vmatpush1.msra.mxu0 0.0
    %2138 = vmatprep.subr.mxu0 0.0
    %2139 = vmatpush1.msra.mxu0 0.0
    %2140 = vmatprep.subr.mxu0 0.0
    %2141 = vmatpush1.msra.mxu0 0.0
    %2142 = vmatprep.subr.mxu0 0.0
    %2143 = vmatpush1.msra.mxu0 0.0
    %2144 = vmatprep.subr.mxu0 0.0
    %2145 = vmatpush1.msra.mxu0 0.0
    %2146 = vmatprep.subr.mxu0 0.0
    %2147 = vmatpush1.msra.mxu0 0.0
    %2148 = vmatprep.mubr.f32.mxu0 0.0
    %2149 = vmatmul.mubr.f32.gmra.mrb[0].mxu0 %v2082
    %v2150 = vpop.f32.mrb[0].mxu0
    %v2151 = vadd.f32 0.0, %v2150
    %v2152 = vpop.f32.mrb[0].mxu0
    %2153 = vdwg.mxu0
    %v2155 = vsel %vm328, %v65, 0
    %2157 = vmatprep.subr.mxu0 0.0
    %2158 = vmatpush1.msra.mxu0 %v272
    %2159 = vmatprep.subr.mxu0 0.0
    %2160 = vmatpush1.msra.mxu0 %v273
    %2161 = vmatprep.subr.mxu0 0.0
    %2162 = vmatpush1.msra.mxu0 %v274
    %2163 = vmatprep.subr.mxu0 0.0
    %2164 = vmatpush1.msra.mxu0 %v275
    %2165 = vmatprep.subr.mxu0 0.0
    %2166 = vmatpush1.msra.mxu0 %v276
    %2167 = vmatprep.subr.mxu0 0.0
    %2168 = vmatpush1.msra.mxu0 %v277
    %2169 = vmatprep.subr.mxu0 0.0
    %2170 = vmatpush1.msra.mxu0 %v278
    %2171 = vmatprep.subr.mxu0 0.0
    %2172 = vmatpush1.msra.mxu0 %v279
    %2173 = vmatprep.subr.mxu0 0.0
    %2174 = vmatpush1.msra.mxu0 0.0
    %2175 = vmatprep.subr.mxu0 0.0
    %2176 = vmatpush1.msra.mxu0 0.0
    %2177 = vmatprep.subr.mxu0 0.0
    %2178 = vmatpush1.msra.mxu0 0.0
    %2179 = vmatprep.subr.mxu0 0.0
    %2180 = vmatpush1.msra.mxu0 0.0
    %2181 = vmatprep.subr.mxu0 0.0
    %2182 = vmatpush1.msra.mxu0 0.0
    %2183 = vmatprep.subr.mxu0 0.0
    %2184 = vmatpush1.msra.mxu0 0.0
    %2185 = vmatprep.subr.mxu0 0.0
    %2186 = vmatpush1.msra.mxu0 0.0
    %2187 = vmatprep.subr.mxu0 0.0
    %2188 = vmatpush1.msra.mxu0 0.0
    %2189 = vmatprep.subr.mxu0 0.0
    %2190 = vmatpush1.msra.mxu0 0.0
    %2191 = vmatprep.subr.mxu0 0.0
    %2192 = vmatpush1.msra.mxu0 0.0
    %2193 = vmatprep.subr.mxu0 0.0
    %2194 = vmatpush1.msra.mxu0 0.0
    %2195 = vmatprep.subr.mxu0 0.0
    %2196 = vmatpush1.msra.mxu0 0.0
    %2197 = vmatprep.subr.mxu0 0.0
    %2198 = vmatpush1.msra.mxu0 0.0
    %2199 = vmatprep.subr.mxu0 0.0
    %2200 = vmatpush1.msra.mxu0 0.0
    %2201 = vmatprep.subr.mxu0 0.0
    %2202 = vmatpush1.msra.mxu0 0.0
    %2203 = vmatprep.subr.mxu0 0.0
    %2204 = vmatpush1.msra.mxu0 0.0
    %2205 = vmatprep.subr.mxu0 0.0
    %2206 = vmatpush1.msra.mxu0 0.0
    %2207 = vmatprep.subr.mxu0 0.0
    %2208 = vmatpush1.msra.mxu0 0.0
    %2209 = vmatprep.subr.mxu0 0.0
    %2210 = vmatpush1.msra.mxu0 0.0
    %2211 = vmatprep.subr.mxu0 0.0
    %2212 = vmatpush1.msra.mxu0 0.0
    %2213 = vmatprep.subr.mxu0 0.0
    %2214 = vmatpush1.msra.mxu0 0.0
    %2215 = vmatprep.subr.mxu0 0.0
    %2216 = vmatpush1.msra.mxu0 0.0
    %2217 = vmatprep.subr.mxu0 0.0
    %2218 = vmatpush1.msra.mxu0 0.0
    %2219 = vmatprep.subr.mxu0 0.0
    %2220 = vmatpush1.msra.mxu0 0.0
    %2221 = vmatprep.mubr.f32.mxu0 0.0
    %2222 = vmatmul.mubr.f32.gmra.mrb[0].mxu0 %v2155
    %v2223 = vpop.f32.mrb[0].mxu0
    %v2224 = vadd.f32 0.0, %v2223
    %v2225 = vpop.f32.mrb[0].mxu0
    %2226 = vdwg.mxu0
    %v2228 = vsel %vm328, %v66, 0
    %2230 = vmatprep.subr.mxu0 0.0
    %2231 = vmatpush1.msra.mxu0 %v280
    %2232 = vmatprep.subr.mxu0 0.0
    %2233 = vmatpush1.msra.mxu0 %v281
    %2234 = vmatprep.subr.mxu0 0.0
    %2235 = vmatpush1.msra.mxu0 %v282
    %2236 = vmatprep.subr.mxu0 0.0
    %2237 = vmatpush1.msra.mxu0 %v283
    %2238 = vmatprep.subr.mxu0 0.0
    %2239 = vmatpush1.msra.mxu0 %v284
    %2240 = vmatprep.subr.mxu0 0.0
    %2241 = vmatpush1.msra.mxu0 %v285
    %2242 = vmatprep.subr.mxu0 0.0
    %2243 = vmatpush1.msra.mxu0 %v286
    %2244 = vmatprep.subr.mxu0 0.0
    %2245 = vmatpush1.msra.mxu0 %v287
    %2246 = vmatprep.subr.mxu0 0.0
    %2247 = vmatpush1.msra.mxu0 0.0
    %2248 = vmatprep.subr.mxu0 0.0
    %2249 = vmatpush1.msra.mxu0 0.0
    %2250 = vmatprep.subr.mxu0 0.0
    %2251 = vmatpush1.msra.mxu0 0.0
    %2252 = vmatprep.subr.mxu0 0.0
    %2253 = vmatpush1.msra.mxu0 0.0
    %2254 = vmatprep.subr.mxu0 0.0
    %2255 = vmatpush1.msra.mxu0 0.0
    %2256 = vmatprep.subr.mxu0 0.0
    %2257 = vmatpush1.msra.mxu0 0.0
    %2258 = vmatprep.subr.mxu0 0.0
    %2259 = vmatpush1.msra.mxu0 0.0
    %2260 = vmatprep.subr.mxu0 0.0
    %2261 = vmatpush1.msra.mxu0 0.0
    %2262 = vmatprep.subr.mxu0 0.0
    %2263 = vmatpush1.msra.mxu0 0.0
    %2264 = vmatprep.subr.mxu0 0.0
    %2265 = vmatpush1.msra.mxu0 0.0
    %2266 = vmatprep.subr.mxu0 0.0
    %2267 = vmatpush1.msra.mxu0 0.0
    %2268 = vmatprep.subr.mxu0 0.0
    %2269 = vmatpush1.msra.mxu0 0.0
    %2270 = vmatprep.subr.mxu0 0.0
    %2271 = vmatpush1.msra.mxu0 0.0
    %2272 = vmatprep.subr.mxu0 0.0
    %2273 = vmatpush1.msra.mxu0 0.0
    %2274 = vmatprep.subr.mxu0 0.0
    %2275 = vmatpush1.msra.mxu0 0.0
    %2276 = vmatprep.subr.mxu0 0.0
    %2277 = vmatpush1.msra.mxu0 0.0
    %2278 = vmatprep.subr.mxu0 0.0
    %2279 = vmatpush1.msra.mxu0 0.0
    %2280 = vmatprep.subr.mxu0 0.0
    %2281 = vmatpush1.msra.mxu0 0.0
    %2282 = vmatprep.subr.mxu0 0.0
    %2283 = vmatpush1.msra.mxu0 0.0
    %2284 = vmatprep.subr.mxu0 0.0
    %2285 = vmatpush1.msra.mxu0 0.0
    %2286 = vmatprep.subr.mxu0 0.0
    %2287 = vmatpush1.msra.mxu0 0.0
    %2288 = vmatprep.subr.mxu0 0.0
    %2289 = vmatpush1.msra.mxu0 0.0
    %2290 = vmatprep.subr.mxu0 0.0
    %2291 = vmatpush1.msra.mxu0 0.0
    %2292 = vmatprep.subr.mxu0 0.0
    %2293 = vmatpush1.msra.mxu0 0.0
    %2294 = vmatprep.mubr.f32.mxu0 0.0
    %2295 = vmatmul.mubr.f32.gmra.mrb[0].mxu0 %v2228
    %v2296 = vpop.f32.mrb[0].mxu0
    %v2297 = vadd.f32 0.0, %v2296
    %v2298 = vpop.f32.mrb[0].mxu0
    %2299 = vdwg.mxu0
    %v2301 = vsel %vm328, %v67, 0
    %2303 = vmatprep.subr.mxu0 0.0
    %2304 = vmatpush1.msra.mxu0 %v288
    %2305 = vmatprep.subr.mxu0 0.0
    %2306 = vmatpush1.msra.mxu0 %v289
    %2307 = vmatprep.subr.mxu0 0.0
    %2308 = vmatpush1.msra.mxu0 %v290
    %2309 = vmatprep.subr.mxu0 0.0
    %2310 = vmatpush1.msra.mxu0 %v291
    %2311 = vmatprep.subr.mxu0 0.0
    %2312 = vmatpush1.msra.mxu0 %v292
    %2313 = vmatprep.subr.mxu0 0.0
    %2314 = vmatpush1.msra.mxu0 %v293
    %2315 = vmatprep.subr.mxu0 0.0
    %2316 = vmatpush1.msra.mxu0 %v294
    %2317 = vmatprep.subr.mxu0 0.0
    %2318 = vmatpush1.msra.mxu0 %v295
    %2319 = vmatprep.subr.mxu0 0.0
    %2320 = vmatpush1.msra.mxu0 0.0
    %2321 = vmatprep.subr.mxu0 0.0
    %2322 = vmatpush1.msra.mxu0 0.0
    %2323 = vmatprep.subr.mxu0 0.0
    %2324 = vmatpush1.msra.mxu0 0.0
    %2325 = vmatprep.subr.mxu0 0.0
    %2326 = vmatpush1.msra.mxu0 0.0
    %2327 = vmatprep.subr.mxu0 0.0
    %2328 = vmatpush1.msra.mxu0 0.0
    %2329 = vmatprep.subr.mxu0 0.0
    %2330 = vmatpush1.msra.mxu0 0.0
    %2331 = vmatprep.subr.mxu0 0.0
    %2332 = vmatpush1.msra.mxu0 0.0
    %2333 = vmatprep.subr.mxu0 0.0
    %2334 = vmatpush1.msra.mxu0 0.0
    %2335 = vmatprep.subr.mxu0 0.0
    %2336 = vmatpush1.msra.mxu0 0.0
    %2337 = vmatprep.subr.mxu0 0.0
    %2338 = vmatpush1.msra.mxu0 0.0
    %2339 = vmatprep.subr.mxu0 0.0
    %2340 = vmatpush1.msra.mxu0 0.0
    %2341 = vmatprep.subr.mxu0 0.0
    %2342 = vmatpush1.msra.mxu0 0.0
    %2343 = vmatprep.subr.mxu0 0.0
    %2344 = vmatpush1.msra.mxu0 0.0
    %2345 = vmatprep.subr.mxu0 0.0
    %2346 = vmatpush1.msra.mxu0 0.0
    %2347 = vmatprep.subr.mxu0 0.0
    %2348 = vmatpush1.msra.mxu0 0.0
    %2349 = vmatprep.subr.mxu0 0.0
    %2350 = vmatpush1.msra.mxu0 0.0
    %2351 = vmatprep.subr.mxu0 0.0
    %2352 = vmatpush1.msra.mxu0 0.0
    %2353 = vmatprep.subr.mxu0 0.0
    %2354 = vmatpush1.msra.mxu0 0.0
    %2355 = vmatprep.subr.mxu0 0.0
    %2356 = vmatpush1.msra.mxu0 0.0
    %2357 = vmatprep.subr.mxu0 0.0
    %2358 = vmatpush1.msra.mxu0 0.0
    %2359 = vmatprep.subr.mxu0 0.0
    %2360 = vmatpush1.msra.mxu0 0.0
    %2361 = vmatprep.subr.mxu0 0.0
    %2362 = vmatpush1.msra.mxu0 0.0
    %2363 = vmatprep.subr.mxu0 0.0
    %2364 = vmatpush1.msra.mxu0 0.0
    %2365 = vmatprep.subr.mxu0 0.0
    %2366 = vmatpush1.msra.mxu0 0.0
    %2367 = vmatprep.mubr.f32.mxu0 0.0
    %2368 = vmatmul.mubr.f32.gmra.mrb[0].mxu0 %v2301
    %v2369 = vpop.f32.mrb[0].mxu0
    %v2370 = vadd.f32 0.0, %v2369
    %v2371 = vpop.f32.mrb[0].mxu0
    %2372 = vdwg.mxu0
    %v2374 = vsel %vm328, %v68, 0
    %2376 = vmatprep.subr.mxu0 0.0
    %2377 = vmatpush1.msra.mxu0 %v296
    %2378 = vmatprep.subr.mxu0 0.0
    %2379 = vmatpush1.msra.mxu0 %v297
    %2380 = vmatprep.subr.mxu0 0.0
    %2381 = vmatpush1.msra.mxu0 %v298
    %2382 = vmatprep.subr.mxu0 0.0
    %2383 = vmatpush1.msra.mxu0 %v299
    %2384 = vmatprep.subr.mxu0 0.0
    %2385 = vmatpush1.msra.mxu0 %v300
    %2386 = vmatprep.subr.mxu0 0.0
    %2387 = vmatpush1.msra.mxu0 %v301
    %2388 = vmatprep.subr.mxu0 0.0
    %2389 = vmatpush1.msra.mxu0 %v302
    %2390 = vmatprep.subr.mxu0 0.0
    %2391 = vmatpush1.msra.mxu0 %v303
    %2392 = vmatprep.subr.mxu0 0.0
    %2393 = vmatpush1.msra.mxu0 0.0
    %2394 = vmatprep.subr.mxu0 0.0
    %2395 = vmatpush1.msra.mxu0 0.0
    %2396 = vmatprep.subr.mxu0 0.0
    %2397 = vmatpush1.msra.mxu0 0.0
    %2398 = vmatprep.subr.mxu0 0.0
    %2399 = vmatpush1.msra.mxu0 0.0
    %2400 = vmatprep.subr.mxu0 0.0
    %2401 = vmatpush1.msra.mxu0 0.0
    %2402 = vmatprep.subr.mxu0 0.0
    %2403 = vmatpush1.msra.mxu0 0.0
    %2404 = vmatprep.subr.mxu0 0.0
    %2405 = vmatpush1.msra.mxu0 0.0
    %2406 = vmatprep.subr.mxu0 0.0
    %2407 = vmatpush1.msra.mxu0 0.0
    %2408 = vmatprep.subr.mxu0 0.0
    %2409 = vmatpush1.msra.mxu0 0.0
    %2410 = vmatprep.subr.mxu0 0.0
    %2411 = vmatpush1.msra.mxu0 0.0
    %2412 = vmatprep.subr.mxu0 0.0
    %2413 = vmatpush1.msra.mxu0 0.0
    %2414 = vmatprep.subr.mxu0 0.0
    %2415 = vmatpush1.msra.mxu0 0.0
    %2416 = vmatprep.subr.mxu0 0.0
    %2417 = vmatpush1.msra.mxu0 0.0
    %2418 = vmatprep.subr.mxu0 0.0
    %2419 = vmatpush1.msra.mxu0 0.0
    %2420 = vmatprep.subr.mxu0 0.0
    %2421 = vmatpush1.msra.mxu0 0.0
    %2422 = vmatprep.subr.mxu0 0.0
    %2423 = vmatpush1.msra.mxu0 0.0
    %2424 = vmatprep.subr.mxu0 0.0
    %2425 = vmatpush1.msra.mxu0 0.0
    %2426 = vmatprep.subr.mxu0 0.0
    %2427 = vmatpush1.msra.mxu0 0.0
    %2428 = vmatprep.subr.mxu0 0.0
    %2429 = vmatpush1.msra.mxu0 0.0
    %2430 = vmatprep.subr.mxu0 0.0
    %2431 = vmatpush1.msra.mxu0 0.0
    %2432 = vmatprep.subr.mxu0 0.0
    %2433 = vmatpush1.msra.mxu0 0.0
    %2434 = vmatprep.subr.mxu0 0.0
    %2435 = vmatpush1.msra.mxu0 0.0
    %2436 = vmatprep.subr.mxu0 0.0
    %2437 = vmatpush1.msra.mxu0 0.0
    %2438 = vmatprep.subr.mxu0 0.0
    %2439 = vmatpush1.msra.mxu0 0.0
    %2440 = vmatprep.mubr.f32.mxu0 0.0
    %2441 = vmatmul.mubr.f32.gmra.mrb[0].mxu0 %v2374
    %v2442 = vpop.f32.mrb[0].mxu0
    %v2443 = vadd.f32 0.0, %v2442
    %v2444 = vpop.f32.mrb[0].mxu0
    %2445 = vdwg.mxu0
    %v2447 = vsel %vm328, %v69, 0
    %2449 = vmatprep.subr.mxu0 0.0
    %2450 = vmatpush1.msra.mxu0 %v304
    %2451 = vmatprep.subr.mxu0 0.0
    %2452 = vmatpush1.msra.mxu0 %v305
    %2453 = vmatprep.subr.mxu0 0.0
    %2454 = vmatpush1.msra.mxu0 %v306
    %2455 = vmatprep.subr.mxu0 0.0
    %2456 = vmatpush1.msra.mxu0 %v307
    %2457 = vmatprep.subr.mxu0 0.0
    %2458 = vmatpush1.msra.mxu0 %v308
    %2459 = vmatprep.subr.mxu0 0.0
    %2460 = vmatpush1.msra.mxu0 %v309
    %2461 = vmatprep.subr.mxu0 0.0
    %2462 = vmatpush1.msra.mxu0 %v310
    %2463 = vmatprep.subr.mxu0 0.0
    %2464 = vmatpush1.msra.mxu0 %v311
    %2465 = vmatprep.subr.mxu0 0.0
    %2466 = vmatpush1.msra.mxu0 0.0
    %2467 = vmatprep.subr.mxu0 0.0
    %2468 = vmatpush1.msra.mxu0 0.0
    %2469 = vmatprep.subr.mxu0 0.0
    %2470 = vmatpush1.msra.mxu0 0.0
    %2471 = vmatprep.subr.mxu0 0.0
    %2472 = vmatpush1.msra.mxu0 0.0
    %2473 = vmatprep.subr.mxu0 0.0
    %2474 = vmatpush1.msra.mxu0 0.0
    %2475 = vmatprep.subr.mxu0 0.0
    %2476 = vmatpush1.msra.mxu0 0.0
    %2477 = vmatprep.subr.mxu0 0.0
    %2478 = vmatpush1.msra.mxu0 0.0
    %2479 = vmatprep.subr.mxu0 0.0
    %2480 = vmatpush1.msra.mxu0 0.0
    %2481 = vmatprep.subr.mxu0 0.0
    %2482 = vmatpush1.msra.mxu0 0.0
    %2483 = vmatprep.subr.mxu0 0.0
    %2484 = vmatpush1.msra.mxu0 0.0
    %2485 = vmatprep.subr.mxu0 0.0
    %2486 = vmatpush1.msra.mxu0 0.0
    %2487 = vmatprep.subr.mxu0 0.0
    %2488 = vmatpush1.msra.mxu0 0.0
    %2489 = vmatprep.subr.mxu0 0.0
    %2490 = vmatpush1.msra.mxu0 0.0
    %2491 = vmatprep.subr.mxu0 0.0
    %2492 = vmatpush1.msra.mxu0 0.0
    %2493 = vmatprep.subr.mxu0 0.0
    %2494 = vmatpush1.msra.mxu0 0.0
    %2495 = vmatprep.subr.mxu0 0.0
    %2496 = vmatpush1.msra.mxu0 0.0
    %2497 = vmatprep.subr.mxu0 0.0
    %2498 = vmatpush1.msra.mxu0 0.0
    %2499 = vmatprep.subr.mxu0 0.0
    %2500 = vmatpush1.msra.mxu0 0.0
    %2501 = vmatprep.subr.mxu0 0.0
    %2502 = vmatpush1.msra.mxu0 0.0
    %2503 = vmatprep.subr.mxu0 0.0
    %2504 = vmatpush1.msra.mxu0 0.0
    %2505 = vmatprep.subr.mxu0 0.0
    %2506 = vmatpush1.msra.mxu0 0.0
    %2507 = vmatprep.subr.mxu0 0.0
    %2508 = vmatpush1.msra.mxu0 0.0
    %2509 = vmatprep.subr.mxu0 0.0
    %2510 = vmatpush1.msra.mxu0 0.0
    %2511 = vmatprep.subr.mxu0 0.0
    %2512 = vmatpush1.msra.mxu0 0.0
    %2513 = vmatprep.mubr.f32.mxu0 0.0
    %2514 = vmatmul.mubr.f32.gmra.mrb[0].mxu0 %v2447
    %v2515 = vpop.f32.mrb[0].mxu0
    %v2516 = vadd.f32 0.0, %v2515
    %v2517 = vpop.f32.mrb[0].mxu0
    %2518 = vdwg.mxu0
    %v2520 = vsel %vm328, %v70, 0
    %2522 = vmatprep.subr.mxu0 0.0
    %2523 = vmatpush1.msra.mxu0 %v312
    %2524 = vmatprep.subr.mxu0 0.0
    %2525 = vmatpush1.msra.mxu0 %v313
    %2526 = vmatprep.subr.mxu0 0.0
    %2527 = vmatpush1.msra.mxu0 %v314
    %2528 = vmatprep.subr.mxu0 0.0
    %2529 = vmatpush1.msra.mxu0 %v315
    %2530 = vmatprep.subr.mxu0 0.0
    %2531 = vmatpush1.msra.mxu0 %v316
    %2532 = vmatprep.subr.mxu0 0.0
    %2533 = vmatpush1.msra.mxu0 %v317
    %2534 = vmatprep.subr.mxu0 0.0
    %2535 = vmatpush1.msra.mxu0 %v318
    %2536 = vmatprep.subr.mxu0 0.0
    %2537 = vmatpush1.msra.mxu0 %v319
    %2538 = vmatprep.subr.mxu0 0.0
    %2539 = vmatpush1.msra.mxu0 0.0
    %2540 = vmatprep.subr.mxu0 0.0
    %2541 = vmatpush1.msra.mxu0 0.0
    %2542 = vmatprep.subr.mxu0 0.0
    %2543 = vmatpush1.msra.mxu0 0.0
    %2544 = vmatprep.subr.mxu0 0.0
    %2545 = vmatpush1.msra.mxu0 0.0
    %2546 = vmatprep.subr.mxu0 0.0
    %2547 = vmatpush1.msra.mxu0 0.0
    %2548 = vmatprep.subr.mxu0 0.0
    %2549 = vmatpush1.msra.mxu0 0.0
    %2550 = vmatprep.subr.mxu0 0.0
    %2551 = vmatpush1.msra.mxu0 0.0
    %2552 = vmatprep.subr.mxu0 0.0
    %2553 = vmatpush1.msra.mxu0 0.0
    %2554 = vmatprep.subr.mxu0 0.0
    %2555 = vmatpush1.msra.mxu0 0.0
    %2556 = vmatprep.subr.mxu0 0.0
    %2557 = vmatpush1.msra.mxu0 0.0
    %2558 = vmatprep.subr.mxu0 0.0
    %2559 = vmatpush1.msra.mxu0 0.0
    %2560 = vmatprep.subr.mxu0 0.0
    %2561 = vmatpush1.msra.mxu0 0.0
    %2562 = vmatprep.subr.mxu0 0.0
    %2563 = vmatpush1.msra.mxu0 0.0
    %2564 = vmatprep.subr.mxu0 0.0
    %2565 = vmatpush1.msra.mxu0 0.0
    %2566 = vmatprep.subr.mxu0 0.0
    %2567 = vmatpush1.msra.mxu0 0.0
    %2568 = vmatprep.subr.mxu0 0.0
    %2569 = vmatpush1.msra.mxu0 0.0
    %2570 = vmatprep.subr.mxu0 0.0
    %2571 = vmatpush1.msra.mxu0 0.0
    %2572 = vmatprep.subr.mxu0 0.0
    %2573 = vmatpush1.msra.mxu0 0.0
    %2574 = vmatprep.subr.mxu0 0.0
    %2575 = vmatpush1.msra.mxu0 0.0
    %2576 = vmatprep.subr.mxu0 0.0
    %2577 = vmatpush1.msra.mxu0 0.0
    %2578 = vmatprep.subr.mxu0 0.0
    %2579 = vmatpush1.msra.mxu0 0.0
    %2580 = vmatprep.subr.mxu0 0.0
    %2581 = vmatpush1.msra.mxu0 0.0
    %2582 = vmatprep.subr.mxu0 0.0
    %2583 = vmatpush1.msra.mxu0 0.0
    %2584 = vmatprep.subr.mxu0 0.0
    %2585 = vmatpush1.msra.mxu0 0.0
    %2586 = vmatprep.mubr.f32.mxu0 0.0
    %2587 = vmatmul.mubr.f32.gmra.mrb[0].mxu0 %v2520
    %v2588 = vpop.f32.mrb[0].mxu0
    %v2589 = vadd.f32 0.0, %v2588
    %v2590 = vpop.f32.mrb[0].mxu0
    %2591 = vdwg.mxu0
    %v2593 = vsel %vm328, %v71, 0
    %2595 = vmatprep.subr.mxu0 0.0
    %2596 = vmatpush1.msra.mxu0 %v320
    %2597 = vmatprep.subr.mxu0 0.0
    %2598 = vmatpush1.msra.mxu0 %v321
    %2599 = vmatprep.subr.mxu0 0.0
    %2600 = vmatpush1.msra.mxu0 %v322
    %2601 = vmatprep.subr.mxu0 0.0
    %2602 = vmatpush1.msra.mxu0 %v323
    %2603 = vmatprep.subr.mxu0 0.0
    %2604 = vmatpush1.msra.mxu0 %v324
    %2605 = vmatprep.subr.mxu0 0.0
    %2606 = vmatpush1.msra.mxu0 %v325
    %2607 = vmatprep.subr.mxu0 0.0
    %2608 = vmatpush1.msra.mxu0 %v326
    %2609 = vmatprep.subr.mxu0 0.0
    %2610 = vmatpush1.msra.mxu0 %v327
    %2611 = vmatprep.subr.mxu0 0.0
    %2612 = vmatpush1.msra.mxu0 0.0
    %2613 = vmatprep.subr.mxu0 0.0
    %2614 = vmatpush1.msra.mxu0 0.0
    %2615 = vmatprep.subr.mxu0 0.0
    %2616 = vmatpush1.msra.mxu0 0.0
    %2617 = vmatprep.subr.mxu0 0.0
    %2618 = vmatpush1.msra.mxu0 0.0
    %2619 = vmatprep.subr.mxu0 0.0
    %2620 = vmatpush1.msra.mxu0 0.0
    %2621 = vmatprep.subr.mxu0 0.0
    %2622 = vmatpush1.msra.mxu0 0.0
    %2623 = vmatprep.subr.mxu0 0.0
    %2624 = vmatpush1.msra.mxu0 0.0
    %2625 = vmatprep.subr.mxu0 0.0
    %2626 = vmatpush1.msra.mxu0 0.0
    %2627 = vmatprep.subr.mxu0 0.0
    %2628 = vmatpush1.msra.mxu0 0.0
    %2629 = vmatprep.subr.mxu0 0.0
    %2630 = vmatpush1.msra.mxu0 0.0
    %2631 = vmatprep.subr.mxu0 0.0
    %2632 = vmatpush1.msra.mxu0 0.0
    %2633 = vmatprep.subr.mxu0 0.0
    %2634 = vmatpush1.msra.mxu0 0.0
    %2635 = vmatprep.subr.mxu0 0.0
    %2636 = vmatpush1.msra.mxu0 0.0
    %2637 = vmatprep.subr.mxu0 0.0
    %2638 = vmatpush1.msra.mxu0 0.0
    %2639 = vmatprep.subr.mxu0 0.0
    %2640 = vmatpush1.msra.mxu0 0.0
    %2641 = vmatprep.subr.mxu0 0.0
    %2642 = vmatpush1.msra.mxu0 0.0
    %2643 = vmatprep.subr.mxu0 0.0
    %2644 = vmatpush1.msra.mxu0 0.0
    %2645 = vmatprep.subr.mxu0 0.0
    %2646 = vmatpush1.msra.mxu0 0.0
    %2647 = vmatprep.subr.mxu0 0.0
    %2648 = vmatpush1.msra.mxu0 0.0
    %2649 = vmatprep.subr.mxu0 0.0
    %2650 = vmatpush1.msra.mxu0 0.0
    %2651 = vmatprep.subr.mxu0 0.0
    %2652 = vmatpush1.msra.mxu0 0.0
    %2653 = vmatprep.subr.mxu0 0.0
    %2654 = vmatpush1.msra.mxu0 0.0
    %2655 = vmatprep.subr.mxu0 0.0
    %2656 = vmatpush1.msra.mxu0 0.0
    %2657 = vmatprep.subr.mxu0 0.0
    %2658 = vmatpush1.msra.mxu0 0.0
    %2659 = vmatprep.mubr.f32.mxu0 0.0
    %2660 = vmatmul.mubr.f32.gmra.mrb[0].mxu0 %v2593
    %v2661 = vpop.f32.mrb[0].mxu0
    %v2662 = vadd.f32 0.0, %v2661
    %v2663 = vpop.f32.mrb[0].mxu0
    %2664 = vdwg.mxu0
    %2665 = vst [vmem:[#allocation7] sm:$0x3] %v399
    %2666 = vst [vmem:[#allocation7 + $0x2] sm:$0x3] %v472
    %2667 = vst [vmem:[#allocation7 + $0x4] sm:$0x3] %v545
    %2668 = vst [vmem:[#allocation7 + $0x6] sm:$0x3] %v618
    %2669 = vst [vmem:[#allocation7 + $0x8] sm:$0x3] %v691
    %2670 = vst [vmem:[#allocation7 + $0xa] sm:$0x3] %v764
    %2671 = vst [vmem:[#allocation7 + $0xc] sm:$0x3] %v837
    %2672 = vst [vmem:[#allocation7 + $0xe] sm:$0x3] %v910
    %2673 = vst [vmem:[#allocation7 + $0x10] sm:$0x3] %v983
    %2674 = vst [vmem:[#allocation7 + $0x12] sm:$0x3] %v1056
    %2675 = vst [vmem:[#allocation7 + $0x14] sm:$0x3] %v1129
    %2676 = vst [vmem:[#allocation7 + $0x16] sm:$0x3] %v1202
    %2677 = vst [vmem:[#allocation7 + $0x18] sm:$0x3] %v1275
    %2678 = vst [vmem:[#allocation7 + $0x1a] sm:$0x3] %v1348
    %2679 = vst [vmem:[#allocation7 + $0x1c] sm:$0x3] %v1421
    %2680 = vst [vmem:[#allocation7 + $0x1e] sm:$0x3] %v1494
    %2681 = vst [vmem:[#allocation7 + $0x20] sm:$0x3] %v1567
    %2682 = vst [vmem:[#allocation7 + $0x22] sm:$0x3] %v1640
    %2683 = vst [vmem:[#allocation7 + $0x24] sm:$0x3] %v1713
    %2684 = vst [vmem:[#allocation7 + $0x26] sm:$0x3] %v1786
    %2685 = vst [vmem:[#allocation7 + $0x28] sm:$0x3] %v1859
    %2686 = vst [vmem:[#allocation7 + $0x2a] sm:$0x3] %v1932
    %2687 = vst [vmem:[#allocation7 + $0x2c] sm:$0x3] %v2005
    %2688 = vst [vmem:[#allocation7 + $0x2e] sm:$0x3] %v2078
    %2689 = vst [vmem:[#allocation7 + $0x30] sm:$0x3] %v2151
    %2690 = vst [vmem:[#allocation7 + $0x32] sm:$0x3] %v2224
    %2691 = vst [vmem:[#allocation7 + $0x34] sm:$0x3] %v2297
    %2692 = vst [vmem:[#allocation7 + $0x36] sm:$0x3] %v2370
    %2693 = vst [vmem:[#allocation7 + $0x38] sm:$0x3] %v2443
    %2694 = vst [vmem:[#allocation7 + $0x3a] sm:$0x3] %v2516
    %2695 = vst [vmem:[#allocation7 + $0x3c] sm:$0x3] %v2589
    %2696 = vst [vmem:[#allocation7 + $0x3e] sm:$0x3] %v2662
    // Predicated region
    $region18: #{tpu_custom_call.1} parent=1 // pred_check
      _
    $region19: #{tpu_custom_call.1} parent=1 // pred_check_branch
      %2698 = sbr.rel (0) target = $region21
    $region20: #{tpu_custom_call.1} parent=1 // pred_region
      %s2700 = ssub.s32 1024, 1024
      %2701 = vsyncadd [#allocation4], %s2700
      %s2702 = sshll.u32 [#allocation7], 4
      %s2703 = int_to_ptr.vmem [resolvable:$true] %s2702
      %2708 = dma.vmem_to_hbm [thread:$0]  %s2703, 1024, %s2, [#allocation4], 32, 32, 2
    $region21: #{tpu_custom_call.1} parent=1 // pred_fallthru
      _
    // Predicated region
    $region22: #{tpu_custom_call.1} parent=1 // pred_check
      _
    $region23: #{tpu_custom_call.1} parent=1 // pred_check_branch
      %2710 = sbr.rel (0) target = $region25
    $region24: #{tpu_custom_call.1} parent=1 // pred_region
      %2711 = dma.done [#allocation4], 1024
    $region25: #{tpu_custom_call.1} parent=1 // pred_fallthru
      _
    %2712 = vsyncpa [#allocation3], 1
    %2713 = vsyncpa [#allocation6], 1
    %2714 = vsyncpa [#allocation4], 1

</llo_original>
